<compile_context>
chip_gen: v7x
topology: tpu7x:2x2x1
jax: 0.10.0
libtpu: 0.0.40
codegen_flags: <defaults>
</compile_context>

<pallas_src>
import functools

import jax
import jax.numpy as jnp
from jax import lax
from jax.experimental import pallas as pl
from jax.experimental.pallas import tpu as pltpu


# --------------------------------------------------------------------------
# Fused kernel: MHA (all heads) + proj + residual + LN + FFN + residual + LN.
#   grid = (B,); per-step working set is a single (S, D) slab + all weights,
#   which fits VMEM trivially at these shapes on every TPU generation.
# --------------------------------------------------------------------------
def _encoder_block_kernel(
    x_ref,
    wq_ref, bq_ref, wk_ref, bk_ref, wv_ref, bv_ref,
    wo_ref, bo_ref, g1_ref, be1_ref,
    w1_ref, b1_ref, w2_ref, b2_ref, g2_ref, be2_ref,
    out_ref, attn_ref,
    *, n_head, d_k, d_v, scale, eps):
  f32 = jnp.float32
  mxu = wq_ref.dtype                       # bf16 (or f32) operands for the MXU

  x = x_ref[0]                             # (S, D) f32 (kept for residual / LN)
  xm = x.astype(mxu)

  # ---- fused-head Q/K/V projections: one matmul per projection ----------
  q = jnp.dot(xm, wq_ref[...], preferred_element_type=f32) + bq_ref[...]   # (S, H*dk)
  k = jnp.dot(xm, wk_ref[...], preferred_element_type=f32) + bk_ref[...]   # (S, H*dk)
  v = jnp.dot(xm, wv_ref[...], preferred_element_type=f32) + bv_ref[...]   # (S, H*dv)

  # ---- per-head scaled-dot-product attention (static unrolled loop) -----
  ctx_heads = []
  for h in range(n_head):
    qh = q[:, h * d_k:(h + 1) * d_k].astype(mxu)           # (S, dk)
    kh = k[:, h * d_k:(h + 1) * d_k].astype(mxu)           # (S, dk)
    vh = v[:, h * d_v:(h + 1) * d_v].astype(mxu)           # (S, dv)

    # scores: contract last dim of both operands (no explicit transpose).
    s = lax.dot_general(qh, kh, (((1,), (1,)), ((), ())),
                        preferred_element_type=f32) * scale            # (S, S)
    s = s - jnp.max(s, axis=-1, keepdims=True)
    p = jnp.exp(s)
    p = p * pl.reciprocal(jnp.sum(p, axis=-1, keepdims=True), approx=True)

    attn_ref[0, h] = p                                                  # (S, S)
    ctx_heads.append(
        jnp.dot(p.astype(mxu), vh, preferred_element_type=f32))         # (S, dv)

  ctx = jnp.concatenate(ctx_heads, axis=-1)                 # (S, H*dv) lane-dense

  # ---- output projection + residual + LayerNorm --------------------------
  h1 = jnp.dot(ctx.astype(mxu), wo_ref[...], preferred_element_type=f32)
  h1 = h1 + bo_ref[...] + x
  mu1 = jnp.mean(h1, axis=-1, keepdims=True)
  var1 = jnp.mean((h1 - mu1) ** 2, axis=-1, keepdims=True)
  y1 = (h1 - mu1) * lax.rsqrt(var1 + eps) * g1_ref[...] + be1_ref[...]   # (S, D)

  # ---- position-wise FFN (1x1 convs == linears) + residual + LayerNorm ---
  a = jnp.dot(y1.astype(mxu), w1_ref[...], preferred_element_type=f32) + b1_ref[...]
  a = jnp.maximum(a, 0.0)                                                # ReLU (f32)
  f = jnp.dot(a.astype(mxu), w2_ref[...], preferred_element_type=f32) + b2_ref[...]
  h2 = f + y1
  mu2 = jnp.mean(h2, axis=-1, keepdims=True)
  var2 = jnp.mean((h2 - mu2) ** 2, axis=-1, keepdims=True)
  out_ref[0] = (h2 - mu2) * lax.rsqrt(var2 + eps) * g2_ref[...] + be2_ref[...]


# --------------------------------------------------------------------------
# One-time parameter prep: cast MXU weight matrices to bf16, reshape 1-D
# vectors to (1, n).  Packed (D, H*dk) projection layout is used directly —
# no per-call head-split reshape/transpose.
# --------------------------------------------------------------------------
def prepare_params(params, mxu_dtype=jnp.bfloat16):
  p = {}
  for w in ("wq", "wk", "wv", "wo", "w1", "w2"):
    p[w] = params[w].astype(mxu_dtype)
  for b in ("bq", "bk", "bv", "bo", "b1", "b2",
            "ln1_g", "ln1_b", "ln2_g", "ln2_b"):
    p[b] = params[b].reshape(1, -1).astype(jnp.float32)
  return p


# --------------------------------------------------------------------------
# Wrapper
# --------------------------------------------------------------------------
def encoder_block(x, p, *, n_head, d_k, d_v, eps=1e-5):
  """x: (B, S, D) float32, p: prepare_params(...) output.
  Returns (out[B,S,D] f32, attn[B,n_head,S,S] f32)."""
  B, S, D = x.shape
  H = n_head
  d_inner = p["w1"].shape[1]
  scale = 1.0 / float(d_k) ** 0.5

  kernel = functools.partial(
      _encoder_block_kernel,
      n_head=H, d_k=d_k, d_v=d_v, scale=scale, eps=eps)

  full2d = lambda shape: pl.BlockSpec(shape, lambda b: (0, 0))

  out, attn = pl.pallas_call(
      kernel,
      out_shape=(
          jax.ShapeDtypeStruct((B, S, D), jnp.float32),
          jax.ShapeDtypeStruct((B, H, S, S), jnp.float32),
      ),
      grid=(B,),
      in_specs=[
          pl.BlockSpec((1, S, D), lambda b: (b, 0, 0)),     # x
          full2d((D, H * d_k)),                             # wq
          full2d((1, H * d_k)),                             # bq
          full2d((D, H * d_k)),                             # wk
          full2d((1, H * d_k)),                             # bk
          full2d((D, H * d_v)),                             # wv
          full2d((1, H * d_v)),                             # bv
          full2d((H * d_v, D)),                             # wo
          full2d((1, D)),                                   # bo
          full2d((1, D)),                                   # ln1 gamma
          full2d((1, D)),                                   # ln1 beta
          full2d((D, d_inner)),                             # w1
          full2d((1, d_inner)),                             # b1
          full2d((d_inner, D)),                             # w2
          full2d((1, D)),                                   # b2
          full2d((1, D)),                                   # ln2 gamma
          full2d((1, D)),                                   # ln2 beta
      ],
      out_specs=[
          pl.BlockSpec((1, S, D), lambda b: (b, 0, 0)),
          pl.BlockSpec((1, H, S, S), lambda b: (b, 0, 0, 0)),
      ],
      compiler_params=pltpu.CompilerParams(
          dimension_semantics=("parallel",)),
  )(x,
    p["wq"], p["bq"], p["wk"], p["bk"], p["wv"], p["bv"],
    p["wo"], p["bo"], p["ln1_g"], p["ln1_b"],
    p["w1"], p["b1"], p["w2"], p["b2"], p["ln2_g"], p["ln2_b"])

  return out, attn


# --------------------------------------------------------------------------
# Deterministic parameter initialization (synthetic, no checkpoints).
# --------------------------------------------------------------------------
def init_params(key, d_model, n_head, d_k, d_v, d_inner):
  ks = jax.random.split(key, 10)
  s = 0.02
  return {
      "wq": s * jax.random.normal(ks[0], (d_model, n_head * d_k), jnp.float32),
      "bq": jnp.zeros((n_head * d_k,), jnp.float32),
      "wk": s * jax.random.normal(ks[1], (d_model, n_head * d_k), jnp.float32),
      "bk": jnp.zeros((n_head * d_k,), jnp.float32),
      "wv": s * jax.random.normal(ks[2], (d_model, n_head * d_v), jnp.float32),
      "bv": jnp.zeros((n_head * d_v,), jnp.float32),
      "wo": s * jax.random.normal(ks[3], (n_head * d_v, d_model), jnp.float32),
      "bo": jnp.zeros((d_model,), jnp.float32),
      "ln1_g": jnp.ones((d_model,), jnp.float32),
      "ln1_b": jnp.zeros((d_model,), jnp.float32),
      "w1": s * jax.random.normal(ks[4], (d_model, d_inner), jnp.float32),
      "b1": jnp.zeros((d_inner,), jnp.float32),
      "w2": s * jax.random.normal(ks[5], (d_inner, d_model), jnp.float32),
      "b2": jnp.zeros((d_model,), jnp.float32),
      "ln2_g": jnp.ones((d_model,), jnp.float32),
      "ln2_b": jnp.zeros((d_model,), jnp.float32),
  }


if __name__ == "__main__":
  # Small shapes consistent with the module's forward: x is (batch, seq, d_model).
  B, S = 2, 8
  d_model, n_head, d_k, d_v, d_inner = 32, 4, 8, 8, 64

  key = jax.random.PRNGKey(0)
  k_x, k_p = jax.random.split(key)
  x = jax.random.normal(k_x, (B, S, d_model), jnp.float32)
  params = prepare_params(init_params(k_p, d_model, n_head, d_k, d_v, d_inner),
                          mxu_dtype=jnp.bfloat16)

  fwd = jax.jit(functools.partial(encoder_block, n_head=n_head, d_k=d_k, d_v=d_v))
  out, attn_w = fwd(x, params)
  out = jax.block_until_ready(out)
  attn_w = jax.block_until_ready(attn_w)

  assert out.shape == (B, S, d_model)
  assert attn_w.shape == (B, n_head, S, S)
  assert bool(jnp.all(jnp.isfinite(out)))
  # softmax rows of the attention weights must sum to ~1
  # (approx-reciprocal on the EUP -> slightly relaxed tolerance)
  assert bool(jnp.allclose(jnp.sum(attn_w, axis=-1), 1.0, atol=5e-3))

  print("KERNEL_OK")
</pallas_src>

<mosaic_0001>
module attributes {stable_mosaic.version = 11 : i64} {
  func.func @_encoder_block_kernel(%arg0: i32, %arg1: memref<1x8x32xf32, #tpu.memory_space<vmem>>, %arg2: memref<32x32xbf16, #tpu.memory_space<vmem>>, %arg3: memref<1x32xf32, #tpu.memory_space<vmem>>, %arg4: memref<32x32xbf16, #tpu.memory_space<vmem>>, %arg5: memref<1x32xf32, #tpu.memory_space<vmem>>, %arg6: memref<32x32xbf16, #tpu.memory_space<vmem>>, %arg7: memref<1x32xf32, #tpu.memory_space<vmem>>, %arg8: memref<32x32xbf16, #tpu.memory_space<vmem>>, %arg9: memref<1x32xf32, #tpu.memory_space<vmem>>, %arg10: memref<1x32xf32, #tpu.memory_space<vmem>>, %arg11: memref<1x32xf32, #tpu.memory_space<vmem>>, %arg12: memref<32x64xbf16, #tpu.memory_space<vmem>>, %arg13: memref<1x64xf32, #tpu.memory_space<vmem>>, %arg14: memref<64x32xbf16, #tpu.memory_space<vmem>>, %arg15: memref<1x32xf32, #tpu.memory_space<vmem>>, %arg16: memref<1x32xf32, #tpu.memory_space<vmem>>, %arg17: memref<1x32xf32, #tpu.memory_space<vmem>>, %arg18: memref<1x8x32xf32, #tpu.memory_space<vmem>>, %arg19: memref<1x4x8x8xf32, #tpu.memory_space<vmem>>) attributes {dimension_semantics = [#tpu.dimension_semantics<parallel>], iteration_bounds = array<i64: 2>, scalar_prefetch = 0 : i64, scratch_operands = 0 : i64, tpu.core_type = #tpu.core_type<tc>, window_params = [{transform_indices = @transform_0, window_bounds = array<i64: 1, 8, 32>}, {pipeline_mode = #tpu.pipeline_mode<synchronous>, transform_indices = @transform_1, window_bounds = array<i64: 32, 32>}, {pipeline_mode = #tpu.pipeline_mode<synchronous>, transform_indices = @transform_2, window_bounds = array<i64: 1, 32>}, {pipeline_mode = #tpu.pipeline_mode<synchronous>, transform_indices = @transform_3, window_bounds = array<i64: 32, 32>}, {pipeline_mode = #tpu.pipeline_mode<synchronous>, transform_indices = @transform_4, window_bounds = array<i64: 1, 32>}, {pipeline_mode = #tpu.pipeline_mode<synchronous>, transform_indices = @transform_5, window_bounds = array<i64: 32, 32>}, {pipeline_mode = #tpu.pipeline_mode<synchronous>, transform_indices = @transform_6, window_bounds = array<i64: 1, 32>}, {pipeline_mode = #tpu.pipeline_mode<synchronous>, transform_indices = @transform_7, window_bounds = array<i64: 32, 32>}, {pipeline_mode = #tpu.pipeline_mode<synchronous>, transform_indices = @transform_8, window_bounds = array<i64: 1, 32>}, {pipeline_mode = #tpu.pipeline_mode<synchronous>, transform_indices = @transform_9, window_bounds = array<i64: 1, 32>}, {pipeline_mode = #tpu.pipeline_mode<synchronous>, transform_indices = @transform_10, window_bounds = array<i64: 1, 32>}, {pipeline_mode = #tpu.pipeline_mode<synchronous>, transform_indices = @transform_11, window_bounds = array<i64: 32, 64>}, {pipeline_mode = #tpu.pipeline_mode<synchronous>, transform_indices = @transform_12, window_bounds = array<i64: 1, 64>}, {pipeline_mode = #tpu.pipeline_mode<synchronous>, transform_indices = @transform_13, window_bounds = array<i64: 64, 32>}, {pipeline_mode = #tpu.pipeline_mode<synchronous>, transform_indices = @transform_14, window_bounds = array<i64: 1, 32>}, {pipeline_mode = #tpu.pipeline_mode<synchronous>, transform_indices = @transform_15, window_bounds = array<i64: 1, 32>}, {pipeline_mode = #tpu.pipeline_mode<synchronous>, transform_indices = @transform_16, window_bounds = array<i64: 1, 32>}, {transform_indices = @transform_17, window_bounds = array<i64: 1, 8, 32>}, {transform_indices = @transform_18, window_bounds = array<i64: 1, 4, 8, 8>}]} {
    %c0 = arith.constant 0 : index
    %c0_0 = arith.constant 0 : index
    %c0_1 = arith.constant 0 : index
    %0 = vector.load %arg1[%c0, %c0_0, %c0_1] : memref<1x8x32xf32, #tpu.memory_space<vmem>>, vector<1x8x32xf32>
    %1 = vector.shape_cast %0 : vector<1x8x32xf32> to vector<8x32xf32>
    %2 = arith.truncf %1 : vector<8x32xf32> to vector<8x32xbf16>
    %c0_2 = arith.constant 0 : index
    %c0_3 = arith.constant 0 : index
    %3 = vector.load %arg2[%c0_2, %c0_3] : memref<32x32xbf16, #tpu.memory_space<vmem>>, vector<32x32xbf16>
    %cst = arith.constant dense<0.000000e+00> : vector<8x32xf32>
    %4 = tpu.matmul %2, %3, %cst {dimension_numbers = #tpu.dot_dimension_numbers<[1], [0], [0], [1], [0, 0, 1, 1], [], []>} : vector<8x32xbf16>, vector<32x32xbf16>, vector<8x32xf32> -> vector<8x32xf32>
    %c0_4 = arith.constant 0 : index
    %c0_5 = arith.constant 0 : index
    %5 = vector.load %arg3[%c0_4, %c0_5] : memref<1x32xf32, #tpu.memory_space<vmem>>, vector<1x32xf32>
    %6 = vector.broadcast %5 : vector<1x32xf32> to vector<8x32xf32>
    %7 = arith.addf %4, %6 : vector<8x32xf32>
    %c0_6 = arith.constant 0 : index
    %c0_7 = arith.constant 0 : index
    %8 = vector.load %arg4[%c0_6, %c0_7] : memref<32x32xbf16, #tpu.memory_space<vmem>>, vector<32x32xbf16>
    %cst_8 = arith.constant dense<0.000000e+00> : vector<8x32xf32>
    %9 = tpu.matmul %2, %8, %cst_8 {dimension_numbers = #tpu.dot_dimension_numbers<[1], [0], [0], [1], [0, 0, 1, 1], [], []>} : vector<8x32xbf16>, vector<32x32xbf16>, vector<8x32xf32> -> vector<8x32xf32>
    %c0_9 = arith.constant 0 : index
    %c0_10 = arith.constant 0 : index
    %10 = vector.load %arg5[%c0_9, %c0_10] : memref<1x32xf32, #tpu.memory_space<vmem>>, vector<1x32xf32>
    %11 = vector.broadcast %10 : vector<1x32xf32> to vector<8x32xf32>
    %12 = arith.addf %9, %11 : vector<8x32xf32>
    %c0_11 = arith.constant 0 : index
    %c0_12 = arith.constant 0 : index
    %13 = vector.load %arg6[%c0_11, %c0_12] : memref<32x32xbf16, #tpu.memory_space<vmem>>, vector<32x32xbf16>
    %cst_13 = arith.constant dense<0.000000e+00> : vector<8x32xf32>
    %14 = tpu.matmul %2, %13, %cst_13 {dimension_numbers = #tpu.dot_dimension_numbers<[1], [0], [0], [1], [0, 0, 1, 1], [], []>} : vector<8x32xbf16>, vector<32x32xbf16>, vector<8x32xf32> -> vector<8x32xf32>
    %c0_14 = arith.constant 0 : index
    %c0_15 = arith.constant 0 : index
    %15 = vector.load %arg7[%c0_14, %c0_15] : memref<1x32xf32, #tpu.memory_space<vmem>>, vector<1x32xf32>
    %16 = vector.broadcast %15 : vector<1x32xf32> to vector<8x32xf32>
    %17 = arith.addf %14, %16 : vector<8x32xf32>
    %18 = vector.extract_strided_slice %7 {offsets = [0, 0], sizes = [8, 8], strides = [1, 1]} : vector<8x32xf32> to vector<8x8xf32>
    %19 = arith.truncf %18 : vector<8x8xf32> to vector<8x8xbf16>
    %20 = vector.extract_strided_slice %12 {offsets = [0, 0], sizes = [8, 8], strides = [1, 1]} : vector<8x32xf32> to vector<8x8xf32>
    %21 = arith.truncf %20 : vector<8x8xf32> to vector<8x8xbf16>
    %22 = vector.extract_strided_slice %17 {offsets = [0, 0], sizes = [8, 8], strides = [1, 1]} : vector<8x32xf32> to vector<8x8xf32>
    %23 = arith.truncf %22 : vector<8x8xf32> to vector<8x8xbf16>
    %cst_16 = arith.constant dense<0.000000e+00> : vector<8x8xf32>
    %24 = tpu.matmul %19, %21, %cst_16 {dimension_numbers = #tpu.dot_dimension_numbers<[1], [1], [0], [0], [0, 0, 1, 0], [], []>} : vector<8x8xbf16>, vector<8x8xbf16>, vector<8x8xf32> -> vector<8x8xf32>
    %cst_17 = arith.constant 0.353553385 : f32
    %25 = vector.broadcast %cst_17 : f32 to vector<8x8xf32>
    %26 = arith.mulf %24, %25 : vector<8x8xf32>
    %cst_18 = arith.constant dense<0xFF800000> : vector<8xf32>
    %27 = vector.multi_reduction <maximumf>, %26, %cst_18 [1] : vector<8x8xf32> to vector<8xf32>
    %28 = vector.shape_cast %27 : vector<8xf32> to vector<8x1xf32>
    %29 = vector.broadcast %28 : vector<8x1xf32> to vector<8x8xf32>
    %30 = arith.subf %26, %29 : vector<8x8xf32>
    %31 = math.exp %30 : vector<8x8xf32>
    %cst_19 = arith.constant dense<0.000000e+00> : vector<8xf32>
    %32 = vector.multi_reduction <add>, %31, %cst_19 [1] : vector<8x8xf32> to vector<8xf32>
    %33 = vector.shape_cast %32 : vector<8xf32> to vector<8x1xf32>
    %34 = tpu.reciprocal %33 {approx = true} : vector<8x1xf32> -> vector<8x1xf32>
    %35 = vector.broadcast %34 : vector<8x1xf32> to vector<8x8xf32>
    %36 = arith.mulf %31, %35 : vector<8x8xf32>
    %c0_20 = arith.constant 0 : index
    %c0_21 = arith.constant 0 : index
    %c0_22 = arith.constant 0 : index
    %c0_23 = arith.constant 0 : index
    %37 = vector.load %arg19[%c0_20, %c0_21, %c0_22, %c0_23] : memref<1x4x8x8xf32, #tpu.memory_space<vmem>>, vector<1x1x8x8xf32>
    %38 = vector.shape_cast %37 : vector<1x1x8x8xf32> to vector<8x8xf32>
    %39 = vector.shape_cast %36 : vector<8x8xf32> to vector<1x1x8x8xf32>
    tpu.vector_store %arg19[%c0_20, %c0_21, %c0_22, %c0_23], %39 {strides = array<i32>} : memref<1x4x8x8xf32, #tpu.memory_space<vmem>>, vector<1x1x8x8xf32>,
    %40 = arith.truncf %36 : vector<8x8xf32> to vector<8x8xbf16>
    %cst_24 = arith.constant dense<0.000000e+00> : vector<8x8xf32>
    %41 = tpu.matmul %40, %23, %cst_24 {dimension_numbers = #tpu.dot_dimension_numbers<[1], [0], [0], [1], [0, 0, 1, 1], [], []>} : vector<8x8xbf16>, vector<8x8xbf16>, vector<8x8xf32> -> vector<8x8xf32>
    %42 = vector.extract_strided_slice %7 {offsets = [0, 8], sizes = [8, 8], strides = [1, 1]} : vector<8x32xf32> to vector<8x8xf32>
    %43 = arith.truncf %42 : vector<8x8xf32> to vector<8x8xbf16>
    %44 = vector.extract_strided_slice %12 {offsets = [0, 8], sizes = [8, 8], strides = [1, 1]} : vector<8x32xf32> to vector<8x8xf32>
    %45 = arith.truncf %44 : vector<8x8xf32> to vector<8x8xbf16>
    %46 = vector.extract_strided_slice %17 {offsets = [0, 8], sizes = [8, 8], strides = [1, 1]} : vector<8x32xf32> to vector<8x8xf32>
    %47 = arith.truncf %46 : vector<8x8xf32> to vector<8x8xbf16>
    %cst_25 = arith.constant dense<0.000000e+00> : vector<8x8xf32>
    %48 = tpu.matmul %43, %45, %cst_25 {dimension_numbers = #tpu.dot_dimension_numbers<[1], [1], [0], [0], [0, 0, 1, 0], [], []>} : vector<8x8xbf16>, vector<8x8xbf16>, vector<8x8xf32> -> vector<8x8xf32>
    %cst_26 = arith.constant 0.353553385 : f32
    %49 = vector.broadcast %cst_26 : f32 to vector<8x8xf32>
    %50 = arith.mulf %48, %49 : vector<8x8xf32>
    %cst_27 = arith.constant dense<0xFF800000> : vector<8xf32>
    %51 = vector.multi_reduction <maximumf>, %50, %cst_27 [1] : vector<8x8xf32> to vector<8xf32>
    %52 = vector.shape_cast %51 : vector<8xf32> to vector<8x1xf32>
    %53 = vector.broadcast %52 : vector<8x1xf32> to vector<8x8xf32>
    %54 = arith.subf %50, %53 : vector<8x8xf32>
    %55 = math.exp %54 : vector<8x8xf32>
    %cst_28 = arith.constant dense<0.000000e+00> : vector<8xf32>
    %56 = vector.multi_reduction <add>, %55, %cst_28 [1] : vector<8x8xf32> to vector<8xf32>
    %57 = vector.shape_cast %56 : vector<8xf32> to vector<8x1xf32>
    %58 = tpu.reciprocal %57 {approx = true} : vector<8x1xf32> -> vector<8x1xf32>
    %59 = vector.broadcast %58 : vector<8x1xf32> to vector<8x8xf32>
    %60 = arith.mulf %55, %59 : vector<8x8xf32>
    %c0_29 = arith.constant 0 : index
    %c1 = arith.constant 1 : index
    %c0_30 = arith.constant 0 : index
    %c0_31 = arith.constant 0 : index
    %61 = vector.load %arg19[%c0_29, %c1, %c0_30, %c0_31] : memref<1x4x8x8xf32, #tpu.memory_space<vmem>>, vector<1x1x8x8xf32>
    %62 = vector.shape_cast %61 : vector<1x1x8x8xf32> to vector<8x8xf32>
    %63 = vector.shape_cast %60 : vector<8x8xf32> to vector<1x1x8x8xf32>
    tpu.vector_store %arg19[%c0_29, %c1, %c0_30, %c0_31], %63 {strides = array<i32>} : memref<1x4x8x8xf32, #tpu.memory_space<vmem>>, vector<1x1x8x8xf32>,
    %64 = arith.truncf %60 : vector<8x8xf32> to vector<8x8xbf16>
    %cst_32 = arith.constant dense<0.000000e+00> : vector<8x8xf32>
    %65 = tpu.matmul %64, %47, %cst_32 {dimension_numbers = #tpu.dot_dimension_numbers<[1], [0], [0], [1], [0, 0, 1, 1], [], []>} : vector<8x8xbf16>, vector<8x8xbf16>, vector<8x8xf32> -> vector<8x8xf32>
    %66 = vector.extract_strided_slice %7 {offsets = [0, 16], sizes = [8, 8], strides = [1, 1]} : vector<8x32xf32> to vector<8x8xf32>
    %67 = arith.truncf %66 : vector<8x8xf32> to vector<8x8xbf16>
    %68 = vector.extract_strided_slice %12 {offsets = [0, 16], sizes = [8, 8], strides = [1, 1]} : vector<8x32xf32> to vector<8x8xf32>
    %69 = arith.truncf %68 : vector<8x8xf32> to vector<8x8xbf16>
    %70 = vector.extract_strided_slice %17 {offsets = [0, 16], sizes = [8, 8], strides = [1, 1]} : vector<8x32xf32> to vector<8x8xf32>
    %71 = arith.truncf %70 : vector<8x8xf32> to vector<8x8xbf16>
    %cst_33 = arith.constant dense<0.000000e+00> : vector<8x8xf32>
    %72 = tpu.matmul %67, %69, %cst_33 {dimension_numbers = #tpu.dot_dimension_numbers<[1], [1], [0], [0], [0, 0, 1, 0], [], []>} : vector<8x8xbf16>, vector<8x8xbf16>, vector<8x8xf32> -> vector<8x8xf32>
    %cst_34 = arith.constant 0.353553385 : f32
    %73 = vector.broadcast %cst_34 : f32 to vector<8x8xf32>
    %74 = arith.mulf %72, %73 : vector<8x8xf32>
    %cst_35 = arith.constant dense<0xFF800000> : vector<8xf32>
    %75 = vector.multi_reduction <maximumf>, %74, %cst_35 [1] : vector<8x8xf32> to vector<8xf32>
    %76 = vector.shape_cast %75 : vector<8xf32> to vector<8x1xf32>
    %77 = vector.broadcast %76 : vector<8x1xf32> to vector<8x8xf32>
    %78 = arith.subf %74, %77 : vector<8x8xf32>
    %79 = math.exp %78 : vector<8x8xf32>
    %cst_36 = arith.constant dense<0.000000e+00> : vector<8xf32>
    %80 = vector.multi_reduction <add>, %79, %cst_36 [1] : vector<8x8xf32> to vector<8xf32>
    %81 = vector.shape_cast %80 : vector<8xf32> to vector<8x1xf32>
    %82 = tpu.reciprocal %81 {approx = true} : vector<8x1xf32> -> vector<8x1xf32>
    %83 = vector.broadcast %82 : vector<8x1xf32> to vector<8x8xf32>
    %84 = arith.mulf %79, %83 : vector<8x8xf32>
    %c0_37 = arith.constant 0 : index
    %c2 = arith.constant 2 : index
    %c0_38 = arith.constant 0 : index
    %c0_39 = arith.constant 0 : index
    %85 = vector.load %arg19[%c0_37, %c2, %c0_38, %c0_39] : memref<1x4x8x8xf32, #tpu.memory_space<vmem>>, vector<1x1x8x8xf32>
    %86 = vector.shape_cast %85 : vector<1x1x8x8xf32> to vector<8x8xf32>
    %87 = vector.shape_cast %84 : vector<8x8xf32> to vector<1x1x8x8xf32>
    tpu.vector_store %arg19[%c0_37, %c2, %c0_38, %c0_39], %87 {strides = array<i32>} : memref<1x4x8x8xf32, #tpu.memory_space<vmem>>, vector<1x1x8x8xf32>,
    %88 = arith.truncf %84 : vector<8x8xf32> to vector<8x8xbf16>
    %cst_40 = arith.constant dense<0.000000e+00> : vector<8x8xf32>
    %89 = tpu.matmul %88, %71, %cst_40 {dimension_numbers = #tpu.dot_dimension_numbers<[1], [0], [0], [1], [0, 0, 1, 1], [], []>} : vector<8x8xbf16>, vector<8x8xbf16>, vector<8x8xf32> -> vector<8x8xf32>
    %90 = vector.extract_strided_slice %7 {offsets = [0, 24], sizes = [8, 8], strides = [1, 1]} : vector<8x32xf32> to vector<8x8xf32>
    %91 = arith.truncf %90 : vector<8x8xf32> to vector<8x8xbf16>
    %92 = vector.extract_strided_slice %12 {offsets = [0, 24], sizes = [8, 8], strides = [1, 1]} : vector<8x32xf32> to vector<8x8xf32>
    %93 = arith.truncf %92 : vector<8x8xf32> to vector<8x8xbf16>
    %94 = vector.extract_strided_slice %17 {offsets = [0, 24], sizes = [8, 8], strides = [1, 1]} : vector<8x32xf32> to vector<8x8xf32>
    %95 = arith.truncf %94 : vector<8x8xf32> to vector<8x8xbf16>
    %cst_41 = arith.constant dense<0.000000e+00> : vector<8x8xf32>
    %96 = tpu.matmul %91, %93, %cst_41 {dimension_numbers = #tpu.dot_dimension_numbers<[1], [1], [0], [0], [0, 0, 1, 0], [], []>} : vector<8x8xbf16>, vector<8x8xbf16>, vector<8x8xf32> -> vector<8x8xf32>
    %cst_42 = arith.constant 0.353553385 : f32
    %97 = vector.broadcast %cst_42 : f32 to vector<8x8xf32>
    %98 = arith.mulf %96, %97 : vector<8x8xf32>
    %cst_43 = arith.constant dense<0xFF800000> : vector<8xf32>
    %99 = vector.multi_reduction <maximumf>, %98, %cst_43 [1] : vector<8x8xf32> to vector<8xf32>
    %100 = vector.shape_cast %99 : vector<8xf32> to vector<8x1xf32>
    %101 = vector.broadcast %100 : vector<8x1xf32> to vector<8x8xf32>
    %102 = arith.subf %98, %101 : vector<8x8xf32>
    %103 = math.exp %102 : vector<8x8xf32>
    %cst_44 = arith.constant dense<0.000000e+00> : vector<8xf32>
    %104 = vector.multi_reduction <add>, %103, %cst_44 [1] : vector<8x8xf32> to vector<8xf32>
    %105 = vector.shape_cast %104 : vector<8xf32> to vector<8x1xf32>
    %106 = tpu.reciprocal %105 {approx = true} : vector<8x1xf32> -> vector<8x1xf32>
    %107 = vector.broadcast %106 : vector<8x1xf32> to vector<8x8xf32>
    %108 = arith.mulf %103, %107 : vector<8x8xf32>
    %c0_45 = arith.constant 0 : index
    %c3 = arith.constant 3 : index
    %c0_46 = arith.constant 0 : index
    %c0_47 = arith.constant 0 : index
    %109 = vector.load %arg19[%c0_45, %c3, %c0_46, %c0_47] : memref<1x4x8x8xf32, #tpu.memory_space<vmem>>, vector<1x1x8x8xf32>
    %110 = vector.shape_cast %109 : vector<1x1x8x8xf32> to vector<8x8xf32>
    %111 = vector.shape_cast %108 : vector<8x8xf32> to vector<1x1x8x8xf32>
    tpu.vector_store %arg19[%c0_45, %c3, %c0_46, %c0_47], %111 {strides = array<i32>} : memref<1x4x8x8xf32, #tpu.memory_space<vmem>>, vector<1x1x8x8xf32>,
    %112 = arith.truncf %108 : vector<8x8xf32> to vector<8x8xbf16>
    %cst_48 = arith.constant dense<0.000000e+00> : vector<8x8xf32>
    %113 = tpu.matmul %112, %95, %cst_48 {dimension_numbers = #tpu.dot_dimension_numbers<[1], [0], [0], [1], [0, 0, 1, 1], [], []>} : vector<8x8xbf16>, vector<8x8xbf16>, vector<8x8xf32> -> vector<8x8xf32>
    %114 = tpu.concatenate %41, %65, %89, %113 in 1 : vector<8x8xf32>, vector<8x8xf32>, vector<8x8xf32>, vector<8x8xf32> -> vector<8x32xf32>
    %115 = arith.truncf %114 : vector<8x32xf32> to vector<8x32xbf16>
    %c0_49 = arith.constant 0 : index
    %c0_50 = arith.constant 0 : index
    %116 = vector.load %arg8[%c0_49, %c0_50] : memref<32x32xbf16, #tpu.memory_space<vmem>>, vector<32x32xbf16>
    %cst_51 = arith.constant dense<0.000000e+00> : vector<8x32xf32>
    %117 = tpu.matmul %115, %116, %cst_51 {dimension_numbers = #tpu.dot_dimension_numbers<[1], [0], [0], [1], [0, 0, 1, 1], [], []>} : vector<8x32xbf16>, vector<32x32xbf16>, vector<8x32xf32> -> vector<8x32xf32>
    %c0_52 = arith.constant 0 : index
    %c0_53 = arith.constant 0 : index
    %118 = vector.load %arg9[%c0_52, %c0_53] : memref<1x32xf32, #tpu.memory_space<vmem>>, vector<1x32xf32>
    %119 = vector.broadcast %118 : vector<1x32xf32> to vector<8x32xf32>
    %120 = arith.addf %117, %119 : vector<8x32xf32>
    %121 = arith.addf %120, %1 : vector<8x32xf32>
    %cst_54 = arith.constant dense<0.000000e+00> : vector<8xf32>
    %122 = vector.multi_reduction <add>, %121, %cst_54 [1] : vector<8x32xf32> to vector<8xf32>
    %123 = vector.shape_cast %122 : vector<8xf32> to vector<8x1xf32>
    %cst_55 = arith.constant 3.200000e+01 : f32
    %124 = vector.broadcast %cst_55 : f32 to vector<8x1xf32>
    %125 = arith.divf %123, %124 : vector<8x1xf32>
    %126 = vector.broadcast %125 : vector<8x1xf32> to vector<8x32xf32>
    %127 = arith.subf %121, %126 : vector<8x32xf32>
    %128 = arith.mulf %127, %127 : vector<8x32xf32>
    %cst_56 = arith.constant dense<0.000000e+00> : vector<8xf32>
    %129 = vector.multi_reduction <add>, %128, %cst_56 [1] : vector<8x32xf32> to vector<8xf32>
    %130 = vector.shape_cast %129 : vector<8xf32> to vector<8x1xf32>
    %cst_57 = arith.constant 3.200000e+01 : f32
    %131 = vector.broadcast %cst_57 : f32 to vector<8x1xf32>
    %132 = arith.divf %130, %131 : vector<8x1xf32>
    %133 = vector.broadcast %125 : vector<8x1xf32> to vector<8x32xf32>
    %134 = arith.subf %121, %133 : vector<8x32xf32>
    %cst_58 = arith.constant 9.99999974E-6 : f32
    %135 = vector.broadcast %cst_58 : f32 to vector<8x1xf32>
    %136 = arith.addf %132, %135 : vector<8x1xf32>
    %137 = math.rsqrt %136 : vector<8x1xf32>
    %138 = vector.broadcast %137 : vector<8x1xf32> to vector<8x32xf32>
    %139 = arith.mulf %134, %138 : vector<8x32xf32>
    %c0_59 = arith.constant 0 : index
    %c0_60 = arith.constant 0 : index
    %140 = vector.load %arg10[%c0_59, %c0_60] : memref<1x32xf32, #tpu.memory_space<vmem>>, vector<1x32xf32>
    %141 = vector.broadcast %140 : vector<1x32xf32> to vector<8x32xf32>
    %142 = arith.mulf %139, %141 : vector<8x32xf32>
    %c0_61 = arith.constant 0 : index
    %c0_62 = arith.constant 0 : index
    %143 = vector.load %arg11[%c0_61, %c0_62] : memref<1x32xf32, #tpu.memory_space<vmem>>, vector<1x32xf32>
    %144 = vector.broadcast %143 : vector<1x32xf32> to vector<8x32xf32>
    %145 = arith.addf %142, %144 : vector<8x32xf32>
    %146 = arith.truncf %145 : vector<8x32xf32> to vector<8x32xbf16>
    %c0_63 = arith.constant 0 : index
    %c0_64 = arith.constant 0 : index
    %147 = vector.load %arg12[%c0_63, %c0_64] : memref<32x64xbf16, #tpu.memory_space<vmem>>, vector<32x64xbf16>
    %cst_65 = arith.constant dense<0.000000e+00> : vector<8x64xf32>
    %148 = tpu.matmul %146, %147, %cst_65 {dimension_numbers = #tpu.dot_dimension_numbers<[1], [0], [0], [1], [0, 0, 1, 1], [], []>} : vector<8x32xbf16>, vector<32x64xbf16>, vector<8x64xf32> -> vector<8x64xf32>
    %c0_66 = arith.constant 0 : index
    %c0_67 = arith.constant 0 : index
    %149 = vector.load %arg13[%c0_66, %c0_67] : memref<1x64xf32, #tpu.memory_space<vmem>>, vector<1x64xf32>
    %150 = vector.broadcast %149 : vector<1x64xf32> to vector<8x64xf32>
    %151 = arith.addf %148, %150 : vector<8x64xf32>
    %cst_68 = arith.constant 0.000000e+00 : f32
    %152 = vector.broadcast %cst_68 : f32 to vector<8x64xf32>
    %153 = arith.maximumf %151, %152 : vector<8x64xf32>
    %154 = arith.truncf %153 : vector<8x64xf32> to vector<8x64xbf16>
    %c0_69 = arith.constant 0 : index
    %c0_70 = arith.constant 0 : index
    %155 = vector.load %arg14[%c0_69, %c0_70] : memref<64x32xbf16, #tpu.memory_space<vmem>>, vector<64x32xbf16>
    %cst_71 = arith.constant dense<0.000000e+00> : vector<8x32xf32>
    %156 = tpu.matmul %154, %155, %cst_71 {dimension_numbers = #tpu.dot_dimension_numbers<[1], [0], [0], [1], [0, 0, 1, 1], [], []>} : vector<8x64xbf16>, vector<64x32xbf16>, vector<8x32xf32> -> vector<8x32xf32>
    %c0_72 = arith.constant 0 : index
    %c0_73 = arith.constant 0 : index
    %157 = vector.load %arg15[%c0_72, %c0_73] : memref<1x32xf32, #tpu.memory_space<vmem>>, vector<1x32xf32>
    %158 = vector.broadcast %157 : vector<1x32xf32> to vector<8x32xf32>
    %159 = arith.addf %156, %158 : vector<8x32xf32>
    %160 = arith.addf %159, %145 : vector<8x32xf32>
    %cst_74 = arith.constant dense<0.000000e+00> : vector<8xf32>
    %161 = vector.multi_reduction <add>, %160, %cst_74 [1] : vector<8x32xf32> to vector<8xf32>
    %162 = vector.shape_cast %161 : vector<8xf32> to vector<8x1xf32>
    %cst_75 = arith.constant 3.200000e+01 : f32
    %163 = vector.broadcast %cst_75 : f32 to vector<8x1xf32>
    %164 = arith.divf %162, %163 : vector<8x1xf32>
    %165 = vector.broadcast %164 : vector<8x1xf32> to vector<8x32xf32>
    %166 = arith.subf %160, %165 : vector<8x32xf32>
    %167 = arith.mulf %166, %166 : vector<8x32xf32>
    %cst_76 = arith.constant dense<0.000000e+00> : vector<8xf32>
    %168 = vector.multi_reduction <add>, %167, %cst_76 [1] : vector<8x32xf32> to vector<8xf32>
    %169 = vector.shape_cast %168 : vector<8xf32> to vector<8x1xf32>
    %cst_77 = arith.constant 3.200000e+01 : f32
    %170 = vector.broadcast %cst_77 : f32 to vector<8x1xf32>
    %171 = arith.divf %169, %170 : vector<8x1xf32>
    %172 = vector.broadcast %164 : vector<8x1xf32> to vector<8x32xf32>
    %173 = arith.subf %160, %172 : vector<8x32xf32>
    %cst_78 = arith.constant 9.99999974E-6 : f32
    %174 = vector.broadcast %cst_78 : f32 to vector<8x1xf32>
    %175 = arith.addf %171, %174 : vector<8x1xf32>
    %176 = math.rsqrt %175 : vector<8x1xf32>
    %177 = vector.broadcast %176 : vector<8x1xf32> to vector<8x32xf32>
    %178 = arith.mulf %173, %177 : vector<8x32xf32>
    %c0_79 = arith.constant 0 : index
    %c0_80 = arith.constant 0 : index
    %179 = vector.load %arg16[%c0_79, %c0_80] : memref<1x32xf32, #tpu.memory_space<vmem>>, vector<1x32xf32>
    %180 = vector.broadcast %179 : vector<1x32xf32> to vector<8x32xf32>
    %181 = arith.mulf %178, %180 : vector<8x32xf32>
    %c0_81 = arith.constant 0 : index
    %c0_82 = arith.constant 0 : index
    %182 = vector.load %arg17[%c0_81, %c0_82] : memref<1x32xf32, #tpu.memory_space<vmem>>, vector<1x32xf32>
    %183 = vector.broadcast %182 : vector<1x32xf32> to vector<8x32xf32>
    %184 = arith.addf %181, %183 : vector<8x32xf32>
    %c0_83 = arith.constant 0 : index
    %c0_84 = arith.constant 0 : index
    %c0_85 = arith.constant 0 : index
    %185 = vector.load %arg18[%c0_83, %c0_84, %c0_85] : memref<1x8x32xf32, #tpu.memory_space<vmem>>, vector<1x8x32xf32>
    %186 = vector.shape_cast %185 : vector<1x8x32xf32> to vector<8x32xf32>
    %187 = vector.shape_cast %184 : vector<8x32xf32> to vector<1x8x32xf32>
    tpu.vector_store %arg18[%c0_83, %c0_84, %c0_85], %187 {strides = array<i32>} : memref<1x8x32xf32, #tpu.memory_space<vmem>>, vector<1x8x32xf32>,
    return
  }
  func.func @transform_0(%arg0: i32) -> (i32, i32, i32) {
    %c0_i32 = arith.constant 0 : i32
    %c0_i32_0 = arith.constant 0 : i32
    %c0_i32_1 = arith.constant 0 : i32
    return %arg0, %c0_i32, %c0_i32_0 : i32, i32, i32
  }
  func.func @transform_1(%arg0: i32) -> (i32, i32) {
    %c0_i32 = arith.constant 0 : i32
    %c0_i32_0 = arith.constant 0 : i32
    %c0_i32_1 = arith.constant 0 : i32
    return %c0_i32, %c0_i32_0 : i32, i32
  }
  func.func @transform_2(%arg0: i32) -> (i32, i32) {
    %c0_i32 = arith.constant 0 : i32
    %c0_i32_0 = arith.constant 0 : i32
    %c0_i32_1 = arith.constant 0 : i32
    return %c0_i32, %c0_i32_0 : i32, i32
  }
  func.func @transform_3(%arg0: i32) -> (i32, i32) {
    %c0_i32 = arith.constant 0 : i32
    %c0_i32_0 = arith.constant 0 : i32
    %c0_i32_1 = arith.constant 0 : i32
    return %c0_i32, %c0_i32_0 : i32, i32
  }
  func.func @transform_4(%arg0: i32) -> (i32, i32) {
    %c0_i32 = arith.constant 0 : i32
    %c0_i32_0 = arith.constant 0 : i32
    %c0_i32_1 = arith.constant 0 : i32
    return %c0_i32, %c0_i32_0 : i32, i32
  }
  func.func @transform_5(%arg0: i32) -> (i32, i32) {
    %c0_i32 = arith.constant 0 : i32
    %c0_i32_0 = arith.constant 0 : i32
    %c0_i32_1 = arith.constant 0 : i32
    return %c0_i32, %c0_i32_0 : i32, i32
  }
  func.func @transform_6(%arg0: i32) -> (i32, i32) {
    %c0_i32 = arith.constant 0 : i32
    %c0_i32_0 = arith.constant 0 : i32
    %c0_i32_1 = arith.constant 0 : i32
    return %c0_i32, %c0_i32_0 : i32, i32
  }
  func.func @transform_7(%arg0: i32) -> (i32, i32) {
    %c0_i32 = arith.constant 0 : i32
    %c0_i32_0 = arith.constant 0 : i32
    %c0_i32_1 = arith.constant 0 : i32
    return %c0_i32, %c0_i32_0 : i32, i32
  }
  func.func @transform_8(%arg0: i32) -> (i32, i32) {
    %c0_i32 = arith.constant 0 : i32
    %c0_i32_0 = arith.constant 0 : i32
    %c0_i32_1 = arith.constant 0 : i32
    return %c0_i32, %c0_i32_0 : i32, i32
  }
  func.func @transform_9(%arg0: i32) -> (i32, i32) {
    %c0_i32 = arith.constant 0 : i32
    %c0_i32_0 = arith.constant 0 : i32
    %c0_i32_1 = arith.constant 0 : i32
    return %c0_i32, %c0_i32_0 : i32, i32
  }
  func.func @transform_10(%arg0: i32) -> (i32, i32) {
    %c0_i32 = arith.constant 0 : i32
    %c0_i32_0 = arith.constant 0 : i32
    %c0_i32_1 = arith.constant 0 : i32
    return %c0_i32, %c0_i32_0 : i32, i32
  }
  func.func @transform_11(%arg0: i32) -> (i32, i32) {
    %c0_i32 = arith.constant 0 : i32
    %c0_i32_0 = arith.constant 0 : i32
    %c0_i32_1 = arith.constant 0 : i32
    return %c0_i32, %c0_i32_0 : i32, i32
  }
  func.func @transform_12(%arg0: i32) -> (i32, i32) {
    %c0_i32 = arith.constant 0 : i32
    %c0_i32_0 = arith.constant 0 : i32
    %c0_i32_1 = arith.constant 0 : i32
    return %c0_i32, %c0_i32_0 : i32, i32
  }
  func.func @transform_13(%arg0: i32) -> (i32, i32) {
    %c0_i32 = arith.constant 0 : i32
    %c0_i32_0 = arith.constant 0 : i32
    %c0_i32_1 = arith.constant 0 : i32
    return %c0_i32, %c0_i32_0 : i32, i32
  }
  func.func @transform_14(%arg0: i32) -> (i32, i32) {
    %c0_i32 = arith.constant 0 : i32
    %c0_i32_0 = arith.constant 0 : i32
    %c0_i32_1 = arith.constant 0 : i32
    return %c0_i32, %c0_i32_0 : i32, i32
  }
  func.func @transform_15(%arg0: i32) -> (i32, i32) {
    %c0_i32 = arith.constant 0 : i32
    %c0_i32_0 = arith.constant 0 : i32
    %c0_i32_1 = arith.constant 0 : i32
    return %c0_i32, %c0_i32_0 : i32, i32
  }
  func.func @transform_16(%arg0: i32) -> (i32, i32) {
    %c0_i32 = arith.constant 0 : i32
    %c0_i32_0 = arith.constant 0 : i32
    %c0_i32_1 = arith.constant 0 : i32
    return %c0_i32, %c0_i32_0 : i32, i32
  }
  func.func @transform_17(%arg0: i32) -> (i32, i32, i32) {
    %c0_i32 = arith.constant 0 : i32
    %c0_i32_0 = arith.constant 0 : i32
    %c0_i32_1 = arith.constant 0 : i32
    return %arg0, %c0_i32, %c0_i32_0 : i32, i32, i32
  }
  func.func @transform_18(%arg0: i32) -> (i32, i32, i32, i32) {
    %c0_i32 = arith.constant 0 : i32
    %c0_i32_0 = arith.constant 0 : i32
    %c0_i32_1 = arith.constant 0 : i32
    %c0_i32_2 = arith.constant 0 : i32
    return %arg0, %c0_i32, %c0_i32_0, %c0_i32_1 : i32, i32, i32, i32
  }
}

</mosaic_0001>

<llo_original>
// kernel: encoder_block.1
$region0: #{encoder_block.1}
  #allocation0 [shape = 'u32[]', space=smem, size = 0x4, offset = 0x4, fixed_abs, tag = 'smem constant byte address 0x4 - core index']
  #allocation1 [shape = 'u32[144,128]{1,0:T(1,128)}', space=vmem, size = 0x12000, scoped, tag = 'internal scratch']
  %s0 = inlined_call_operand.vmem [shape: f32[2,8,32], index: 0, kind: input, shape index: {}]
  %s1 = inlined_call_operand.vmem [shape: bf16[32,32], index: 1, kind: input, shape index: {}]
  %s2 = inlined_call_operand.vmem [shape: f32[1,32], index: 2, kind: input, shape index: {}]
  %s3 = inlined_call_operand.vmem [shape: bf16[32,32], index: 3, kind: input, shape index: {}]
  %s4 = inlined_call_operand.hbm [shape: f32[1,32], index: 4, kind: input, shape index: {}]
  %s5 = inlined_call_operand.vmem [shape: bf16[32,32], index: 5, kind: input, shape index: {}]
  %s6 = inlined_call_operand.hbm [shape: f32[1,32], index: 6, kind: input, shape index: {}]
  %s7 = inlined_call_operand.vmem [shape: bf16[32,32], index: 7, kind: input, shape index: {}]
  %s8 = inlined_call_operand.hbm [shape: f32[1,32], index: 8, kind: input, shape index: {}]
  %s9 = inlined_call_operand.hbm [shape: f32[1,32], index: 9, kind: input, shape index: {}]
  %s10 = inlined_call_operand.hbm [shape: f32[1,32], index: 10, kind: input, shape index: {}]
  %s11 = inlined_call_operand.hbm [shape: bf16[32,64], index: 11, kind: input, shape index: {}]
  %s12 = inlined_call_operand.hbm [shape: f32[1,64], index: 12, kind: input, shape index: {}]
  %s13 = inlined_call_operand.vmem [shape: bf16[64,32], index: 13, kind: input, shape index: {}]
  %s14 = inlined_call_operand.hbm [shape: f32[1,32], index: 14, kind: input, shape index: {}]
  %s15 = inlined_call_operand.hbm [shape: f32[1,32], index: 15, kind: input, shape index: {}]
  %s16 = inlined_call_operand.hbm [shape: f32[1,32], index: 16, kind: input, shape index: {}]
  %s17 = inlined_call_operand.hbm [shape: f32[2,8,32], index: 17, kind: output, shape index: {0}]
  %s18 = inlined_call_operand.hbm [shape: f32[2,4,8,8], index: 18, kind: output, shape index: {1}]
  %19 = xla_tuple %s17, %s18
  %s20 = sld [smem:[#allocation0]]
  $region149: #{encoder_block.1} parent=0
    _
  %s22 = ssub.s32 1, %s20
  %s23 = scalar_select 0, %s22, %s20
  $region1: #{encoder_block.1} parent=0
    #allocation2 [shape = 'u8[512]{0}', space=vmem, size = 0x400, scoped, tag = 'input window, operand 4, single buffered']
    #allocation3 [shape = 's32[2]{0}', space=sflag, size = 0x8, scoped, tag = 'scoped memory for encoder_block.1']
    #allocation4 [shape = 's32[2]{0}', space=sflag, size = 0x8, scoped, tag = 'scoped memory for encoder_block.1']
    #allocation5 [shape = 'u8[512]{0}', space=vmem, size = 0x400, scoped, tag = 'input window, operand 6, single buffered']
    #allocation6 [shape = 's32[1]{0}', space=sflag, size = 0x4, scoped, tag = 'scoped memory for encoder_block.1']
    #allocation7 [shape = 'u8[512]{0}', space=vmem, size = 0x400, scoped, tag = 'input window, operand 8, single buffered']
    #allocation8 [shape = 'u8[512]{0}', space=vmem, size = 0x400, scoped, tag = 'input window, operand 9, single buffered']
    #allocation9 [shape = 's32[1]{0}', space=sflag, size = 0x4, scoped, tag = 'scoped memory for encoder_block.1']
    #allocation10 [shape = 'u8[512]{0}', space=vmem, size = 0x400, scoped, tag = 'input window, operand 10, single buffered']
    #allocation11 [shape = 'u8[8192]{0}', space=vmem, size = 0x2000, scoped, tag = 'input window, operand 11, single buffered']
    #allocation12 [shape = 's32[1]{0}', space=sflag, size = 0x4, scoped, tag = 'scoped memory for encoder_block.1']
    #allocation13 [shape = 'u8[512]{0}', space=vmem, size = 0x400, scoped, tag = 'input window, operand 12, single buffered']
    #allocation14 [shape = 'u8[512]{0}', space=vmem, size = 0x400, scoped, tag = 'input window, operand 14, single buffered']
    #allocation15 [shape = 's32[1]{0}', space=sflag, size = 0x4, scoped, tag = 'scoped memory for encoder_block.1']
    #allocation16 [shape = 'u8[512]{0}', space=vmem, size = 0x400, scoped, tag = 'input window, operand 15, single buffered']
    #allocation17 [shape = 'u8[512]{0}', space=vmem, size = 0x400, scoped, tag = 'input window, operand 16, single buffered']
    #allocation18 [shape = 's32[1]{0}', space=sflag, size = 0x4, scoped, tag = 'scoped memory for encoder_block.1']
    #allocation19 [shape = 'u8[8192]{0}', space=vmem, size = 0x2000, scoped, tag = 'output window, operand 0']
    #allocation20 [shape = 'u8[32768]{0}', space=vmem, size = 0x8000, scoped, tag = 'output window, operand 1']
    #allocation21 [shape = 's32[2]{0}', space=sflag, size = 0x8, scoped, tag = 'scoped memory for encoder_block.1']
    %24 = vsyncpa [#allocation3], 0
    %25 = vsyncpa [#allocation6], 0
    %26 = vsyncpa [#allocation9], 0
    %27 = vsyncpa [#allocation12], 0
    %28 = vsyncpa [#allocation15], 0
    %29 = vsyncpa [#allocation18], 0
    %30 = vsyncpa [#allocation4], 0
    %s31 = scalar_lea.sflag [#allocation4], 1
    %32 = vsyncpa %s31, 0
    %33 = vsyncpa [#allocation21], 0
    %s34 = scalar_lea.sflag [#allocation21], 1
    %35 = vsyncpa %s34, 0
    loop: start=0, step=1, limit=4
    $region2: #{encoder_block.1} parent=1 // loop_pre_header
      _
    $region3: #{encoder_block.1} parent=1 // loop_header
      %s37 = sphi 0, %s41
      %p38 = scmp.ge.s32.totalorder %s37, 4
      %s47 = sphi 0, %s49
      %s50 = sphi 0, %s47
      %s51 = sphi 0, %s50
      %s67 = sphi 0, %s51
      %s71 = sphi 0, %s71
      %s73 = sphi 0, %s71
      %s74 = sphi 0, %s73
      %s88 = sphi 0, %s74
      %s92 = sphi 0, %s92
      %s94 = sphi 0, %s92
      %s95 = sphi 0, %s94
      %s109 = sphi 0, %s95
      %s113 = sphi 0, %s113
      %s115 = sphi 0, %s113
      %s116 = sphi 0, %s115
      %s130 = sphi 0, %s116
      %s134 = sphi 0, %s134
      %s136 = sphi 0, %s134
      %s137 = sphi 0, %s136
      %s151 = sphi 0, %s137
      %s155 = sphi 0, %s155
      %s157 = sphi 0, %s155
      %s158 = sphi 0, %s157
      %s172 = sphi 0, %s158
      %s176 = sphi 0, %s176
      %s178 = sphi 0, %s176
      %s179 = sphi 0, %s178
      %s193 = sphi 0, %s179
      %s197 = sphi 0, %s197
      %s199 = sphi 0, %s197
      %s200 = sphi 0, %s199
      %s214 = sphi 0, %s200
      %s218 = sphi 0, %s218
      %s220 = sphi 0, %s218
      %s221 = sphi 0, %s220
      %s235 = sphi 0, %s221
      %s239 = sphi 0, %s239
      %s241 = sphi 0, %s239
      %s242 = sphi 0, %s241
      %s256 = sphi 0, %s242
      %s260 = sphi 0, %s260
      %s262 = sphi 0, %s260
      %s263 = sphi 0, %s262
      %s277 = sphi 0, %s263
      %s281 = sphi 0, %s281
      %s283 = sphi 0, %s281
      %s284 = sphi 0, %s283
      %s298 = sphi 0, %s284
      %s302 = sphi 0, %s302
      %s304 = sphi 0, %s302
      %s305 = sphi 0, %s304
      %s319 = sphi 0, %s305
      %s323 = sphi 0, %s323
      %s325 = sphi 0, %s323
      %s326 = sphi 0, %s325
      %s340 = sphi 0, %s326
      %s344 = sphi 0, %s344
      %s346 = sphi 0, %s344
      %s347 = sphi 0, %s346
      %s361 = sphi 0, %s347
      %s365 = sphi 0, %s365
      %s367 = sphi 0, %s365
      %s368 = sphi 0, %s367
      %s382 = sphi 0, %s368
      %s386 = sphi 0, %s386
      %s388 = sphi 0, %s386
      %s389 = sphi 0, %s388
      %s403 = sphi 0, %s389
      %s409 = sphi 0, %s411
      %s412 = sphi 0, %s409
      %s413 = sphi 0, %s412
      %s429 = sphi 0, %s413
      %s435 = sphi 0, %s437
      %s438 = sphi 0, %s435
      %s439 = sphi 0, %s438
      %s455 = sphi 0, %s439
    $region4: #{encoder_block.1} parent=1 // loop_header_branch
      %40 = sbr.rel (%p38) target = $region8
    $region5: #{encoder_block.1} parent=1 // loop_body
      %s42 = ssub.s32 %s37, 1
      %s43 = ssub.s32 %s37, 2
      %s44 = sadd.s32 %s37, 1
      %s45 = ssub.s32 %s37, %s44
      %p46 = scmp.eq.s32.totalorder %s45, 0
      %s48 = sadd.s32 %s47, 1
      %s49 = scalar_select %p46, %s47, %s48
      %p52 = pneg %p46
      %p53 = scmp.eq.s32.totalorder %s37, 1
      %p54 = por %p52, %p53
      %p55 = scmp.ne.s32.totalorder %s47, %s50
      %p56 = scmp.eq.s32.totalorder %s37, 0
      %p57 = por %p55, %p56
      %p58 = scmp.ne.s32.totalorder %s47, %s50
      %p59 = scmp.eq.s32.totalorder %s42, 1
      %p60 = por %p58, %p59
      %p61 = scmp.ne.s32.totalorder %s50, %s51
      %p62 = scmp.eq.s32.totalorder %s42, 0
      %p63 = por %p61, %p62
      %p64 = scmp.ne.s32.totalorder %s50, %s51
      %p65 = scmp.eq.s32.totalorder %s43, 1
      %p66 = por %p64, %p65
      %p68 = scmp.ne.s32.totalorder %s51, %s67
      %p69 = scmp.eq.s32.totalorder %s43, 0
      %p70 = por %p68, %p69
      %s72 = sadd.s32 %s71, 1
      %p75 = scmp.eq.s32.totalorder %s37, 1
      %p76 = scmp.ne.s32.totalorder %s71, %s73
      %p77 = scmp.eq.s32.totalorder %s37, 0
      %p78 = por %p76, %p77
      %p79 = scmp.ne.s32.totalorder %s71, %s73
      %p80 = scmp.eq.s32.totalorder %s42, 1
      %p81 = por %p79, %p80
      %p82 = scmp.ne.s32.totalorder %s73, %s74
      %p83 = scmp.eq.s32.totalorder %s42, 0
      %p84 = por %p82, %p83
      %p85 = scmp.ne.s32.totalorder %s73, %s74
      %p86 = scmp.eq.s32.totalorder %s43, 1
      %p87 = por %p85, %p86
      %p89 = scmp.ne.s32.totalorder %s74, %s88
      %p90 = scmp.eq.s32.totalorder %s43, 0
      %p91 = por %p89, %p90
      %s93 = sadd.s32 %s92, 1
      %p96 = scmp.eq.s32.totalorder %s37, 1
      %p97 = scmp.ne.s32.totalorder %s92, %s94
      %p98 = scmp.eq.s32.totalorder %s37, 0
      %p99 = por %p97, %p98
      %p100 = scmp.ne.s32.totalorder %s92, %s94
      %p101 = scmp.eq.s32.totalorder %s42, 1
      %p102 = por %p100, %p101
      %p103 = scmp.ne.s32.totalorder %s94, %s95
      %p104 = scmp.eq.s32.totalorder %s42, 0
      %p105 = por %p103, %p104
      %p106 = scmp.ne.s32.totalorder %s94, %s95
      %p107 = scmp.eq.s32.totalorder %s43, 1
      %p108 = por %p106, %p107
      %p110 = scmp.ne.s32.totalorder %s95, %s109
      %p111 = scmp.eq.s32.totalorder %s43, 0
      %p112 = por %p110, %p111
      %s114 = sadd.s32 %s113, 1
      %p117 = scmp.eq.s32.totalorder %s37, 1
      %p118 = scmp.ne.s32.totalorder %s113, %s115
      %p119 = scmp.eq.s32.totalorder %s37, 0
      %p120 = por %p118, %p119
      %p121 = scmp.ne.s32.totalorder %s113, %s115
      %p122 = scmp.eq.s32.totalorder %s42, 1
      %p123 = por %p121, %p122
      %p124 = scmp.ne.s32.totalorder %s115, %s116
      %p125 = scmp.eq.s32.totalorder %s42, 0
      %p126 = por %p124, %p125
      %p127 = scmp.ne.s32.totalorder %s115, %s116
      %p128 = scmp.eq.s32.totalorder %s43, 1
      %p129 = por %p127, %p128
      %p131 = scmp.ne.s32.totalorder %s116, %s130
      %p132 = scmp.eq.s32.totalorder %s43, 0
      %p133 = por %p131, %p132
      %s135 = sadd.s32 %s134, 1
      %p138 = scmp.eq.s32.totalorder %s37, 1
      %p139 = scmp.ne.s32.totalorder %s134, %s136
      %p140 = scmp.eq.s32.totalorder %s37, 0
      %p141 = por %p139, %p140
      %p142 = scmp.ne.s32.totalorder %s134, %s136
      %p143 = scmp.eq.s32.totalorder %s42, 1
      %p144 = por %p142, %p143
      %p145 = scmp.ne.s32.totalorder %s136, %s137
      %p146 = scmp.eq.s32.totalorder %s42, 0
      %p147 = por %p145, %p146
      %p148 = scmp.ne.s32.totalorder %s136, %s137
      %p149 = scmp.eq.s32.totalorder %s43, 1
      %p150 = por %p148, %p149
      %p152 = scmp.ne.s32.totalorder %s137, %s151
      %p153 = scmp.eq.s32.totalorder %s43, 0
      %p154 = por %p152, %p153
      %s156 = sadd.s32 %s155, 1
      %p159 = scmp.eq.s32.totalorder %s37, 1
      %p160 = scmp.ne.s32.totalorder %s155, %s157
      %p161 = scmp.eq.s32.totalorder %s37, 0
      %p162 = por %p160, %p161
      %p163 = scmp.ne.s32.totalorder %s155, %s157
      %p164 = scmp.eq.s32.totalorder %s42, 1
      %p165 = por %p163, %p164
      %p166 = scmp.ne.s32.totalorder %s157, %s158
      %p167 = scmp.eq.s32.totalorder %s42, 0
      %p168 = por %p166, %p167
      %p169 = scmp.ne.s32.totalorder %s157, %s158
      %p170 = scmp.eq.s32.totalorder %s43, 1
      %p171 = por %p169, %p170
      %p173 = scmp.ne.s32.totalorder %s158, %s172
      %p174 = scmp.eq.s32.totalorder %s43, 0
      %p175 = por %p173, %p174
      %s177 = sadd.s32 %s176, 1
      %p180 = scmp.eq.s32.totalorder %s37, 1
      %p181 = scmp.ne.s32.totalorder %s176, %s178
      %p182 = scmp.eq.s32.totalorder %s37, 0
      %p183 = por %p181, %p182
      %p184 = scmp.ne.s32.totalorder %s176, %s178
      %p185 = scmp.eq.s32.totalorder %s42, 1
      %p186 = por %p184, %p185
      %p187 = scmp.ne.s32.totalorder %s178, %s179
      %p188 = scmp.eq.s32.totalorder %s42, 0
      %p189 = por %p187, %p188
      %p190 = scmp.ne.s32.totalorder %s178, %s179
      %p191 = scmp.eq.s32.totalorder %s43, 1
      %p192 = por %p190, %p191
      %p194 = scmp.ne.s32.totalorder %s179, %s193
      %p195 = scmp.eq.s32.totalorder %s43, 0
      %p196 = por %p194, %p195
      %s198 = sadd.s32 %s197, 1
      %p201 = scmp.eq.s32.totalorder %s37, 1
      %p202 = scmp.ne.s32.totalorder %s197, %s199
      %p203 = scmp.eq.s32.totalorder %s37, 0
      %p204 = por %p202, %p203
      %p205 = scmp.ne.s32.totalorder %s197, %s199
      %p206 = scmp.eq.s32.totalorder %s42, 1
      %p207 = por %p205, %p206
      %p208 = scmp.ne.s32.totalorder %s199, %s200
      %p209 = scmp.eq.s32.totalorder %s42, 0
      %p210 = por %p208, %p209
      %p211 = scmp.ne.s32.totalorder %s199, %s200
      %p212 = scmp.eq.s32.totalorder %s43, 1
      %p213 = por %p211, %p212
      %p215 = scmp.ne.s32.totalorder %s200, %s214
      %p216 = scmp.eq.s32.totalorder %s43, 0
      %p217 = por %p215, %p216
      %s219 = sadd.s32 %s218, 1
      %p222 = scmp.eq.s32.totalorder %s37, 1
      %p223 = scmp.ne.s32.totalorder %s218, %s220
      %p224 = scmp.eq.s32.totalorder %s37, 0
      %p225 = por %p223, %p224
      %p226 = scmp.ne.s32.totalorder %s218, %s220
      %p227 = scmp.eq.s32.totalorder %s42, 1
      %p228 = por %p226, %p227
      %p229 = scmp.ne.s32.totalorder %s220, %s221
      %p230 = scmp.eq.s32.totalorder %s42, 0
      %p231 = por %p229, %p230
      %p232 = scmp.ne.s32.totalorder %s220, %s221
      %p233 = scmp.eq.s32.totalorder %s43, 1
      %p234 = por %p232, %p233
      %p236 = scmp.ne.s32.totalorder %s221, %s235
      %p237 = scmp.eq.s32.totalorder %s43, 0
      %p238 = por %p236, %p237
      %s240 = sadd.s32 %s239, 1
      %p243 = scmp.eq.s32.totalorder %s37, 1
      %p244 = scmp.ne.s32.totalorder %s239, %s241
      %p245 = scmp.eq.s32.totalorder %s37, 0
      %p246 = por %p244, %p245
      %p247 = scmp.ne.s32.totalorder %s239, %s241
      %p248 = scmp.eq.s32.totalorder %s42, 1
      %p249 = por %p247, %p248
      %p250 = scmp.ne.s32.totalorder %s241, %s242
      %p251 = scmp.eq.s32.totalorder %s42, 0
      %p252 = por %p250, %p251
      %p253 = scmp.ne.s32.totalorder %s241, %s242
      %p254 = scmp.eq.s32.totalorder %s43, 1
      %p255 = por %p253, %p254
      %p257 = scmp.ne.s32.totalorder %s242, %s256
      %p258 = scmp.eq.s32.totalorder %s43, 0
      %p259 = por %p257, %p258
      %s261 = sadd.s32 %s260, 1
      %p264 = scmp.eq.s32.totalorder %s37, 1
      %p265 = scmp.ne.s32.totalorder %s260, %s262
      %p266 = scmp.eq.s32.totalorder %s37, 0
      %p267 = por %p265, %p266
      %p268 = scmp.ne.s32.totalorder %s260, %s262
      %p269 = scmp.eq.s32.totalorder %s42, 1
      %p270 = por %p268, %p269
      %p271 = scmp.ne.s32.totalorder %s262, %s263
      %p272 = scmp.eq.s32.totalorder %s42, 0
      %p273 = por %p271, %p272
      %p274 = scmp.ne.s32.totalorder %s262, %s263
      %p275 = scmp.eq.s32.totalorder %s43, 1
      %p276 = por %p274, %p275
      %p278 = scmp.ne.s32.totalorder %s263, %s277
      %p279 = scmp.eq.s32.totalorder %s43, 0
      %p280 = por %p278, %p279
      %s282 = sadd.s32 %s281, 1
      %p285 = scmp.eq.s32.totalorder %s37, 1
      %p286 = scmp.ne.s32.totalorder %s281, %s283
      %p287 = scmp.eq.s32.totalorder %s37, 0
      %p288 = por %p286, %p287
      %p289 = scmp.ne.s32.totalorder %s281, %s283
      %p290 = scmp.eq.s32.totalorder %s42, 1
      %p291 = por %p289, %p290
      %p292 = scmp.ne.s32.totalorder %s283, %s284
      %p293 = scmp.eq.s32.totalorder %s42, 0
      %p294 = por %p292, %p293
      %p295 = scmp.ne.s32.totalorder %s283, %s284
      %p296 = scmp.eq.s32.totalorder %s43, 1
      %p297 = por %p295, %p296
      %p299 = scmp.ne.s32.totalorder %s284, %s298
      %p300 = scmp.eq.s32.totalorder %s43, 0
      %p301 = por %p299, %p300
      %s303 = sadd.s32 %s302, 1
      %p306 = scmp.eq.s32.totalorder %s37, 1
      %p307 = scmp.ne.s32.totalorder %s302, %s304
      %p308 = scmp.eq.s32.totalorder %s37, 0
      %p309 = por %p307, %p308
      %p310 = scmp.ne.s32.totalorder %s302, %s304
      %p311 = scmp.eq.s32.totalorder %s42, 1
      %p312 = por %p310, %p311
      %p313 = scmp.ne.s32.totalorder %s304, %s305
      %p314 = scmp.eq.s32.totalorder %s42, 0
      %p315 = por %p313, %p314
      %p316 = scmp.ne.s32.totalorder %s304, %s305
      %p317 = scmp.eq.s32.totalorder %s43, 1
      %p318 = por %p316, %p317
      %p320 = scmp.ne.s32.totalorder %s305, %s319
      %p321 = scmp.eq.s32.totalorder %s43, 0
      %p322 = por %p320, %p321
      %s324 = sadd.s32 %s323, 1
      %p327 = scmp.eq.s32.totalorder %s37, 1
      %p328 = scmp.ne.s32.totalorder %s323, %s325
      %p329 = scmp.eq.s32.totalorder %s37, 0
      %p330 = por %p328, %p329
      %p331 = scmp.ne.s32.totalorder %s323, %s325
      %p332 = scmp.eq.s32.totalorder %s42, 1
      %p333 = por %p331, %p332
      %p334 = scmp.ne.s32.totalorder %s325, %s326
      %p335 = scmp.eq.s32.totalorder %s42, 0
      %p336 = por %p334, %p335
      %p337 = scmp.ne.s32.totalorder %s325, %s326
      %p338 = scmp.eq.s32.totalorder %s43, 1
      %p339 = por %p337, %p338
      %p341 = scmp.ne.s32.totalorder %s326, %s340
      %p342 = scmp.eq.s32.totalorder %s43, 0
      %p343 = por %p341, %p342
      %s345 = sadd.s32 %s344, 1
      %p348 = scmp.eq.s32.totalorder %s37, 1
      %p349 = scmp.ne.s32.totalorder %s344, %s346
      %p350 = scmp.eq.s32.totalorder %s37, 0
      %p351 = por %p349, %p350
      %p352 = scmp.ne.s32.totalorder %s344, %s346
      %p353 = scmp.eq.s32.totalorder %s42, 1
      %p354 = por %p352, %p353
      %p355 = scmp.ne.s32.totalorder %s346, %s347
      %p356 = scmp.eq.s32.totalorder %s42, 0
      %p357 = por %p355, %p356
      %p358 = scmp.ne.s32.totalorder %s346, %s347
      %p359 = scmp.eq.s32.totalorder %s43, 1
      %p360 = por %p358, %p359
      %p362 = scmp.ne.s32.totalorder %s347, %s361
      %p363 = scmp.eq.s32.totalorder %s43, 0
      %p364 = por %p362, %p363
      %s366 = sadd.s32 %s365, 1
      %p369 = scmp.eq.s32.totalorder %s37, 1
      %p370 = scmp.ne.s32.totalorder %s365, %s367
      %p371 = scmp.eq.s32.totalorder %s37, 0
      %p372 = por %p370, %p371
      %p373 = scmp.ne.s32.totalorder %s365, %s367
      %p374 = scmp.eq.s32.totalorder %s42, 1
      %p375 = por %p373, %p374
      %p376 = scmp.ne.s32.totalorder %s367, %s368
      %p377 = scmp.eq.s32.totalorder %s42, 0
      %p378 = por %p376, %p377
      %p379 = scmp.ne.s32.totalorder %s367, %s368
      %p380 = scmp.eq.s32.totalorder %s43, 1
      %p381 = por %p379, %p380
      %p383 = scmp.ne.s32.totalorder %s368, %s382
      %p384 = scmp.eq.s32.totalorder %s43, 0
      %p385 = por %p383, %p384
      %s387 = sadd.s32 %s386, 1
      %p390 = scmp.eq.s32.totalorder %s37, 1
      %p391 = scmp.ne.s32.totalorder %s386, %s388
      %p392 = scmp.eq.s32.totalorder %s37, 0
      %p393 = por %p391, %p392
      %p394 = scmp.ne.s32.totalorder %s386, %s388
      %p395 = scmp.eq.s32.totalorder %s42, 1
      %p396 = por %p394, %p395
      %p397 = scmp.ne.s32.totalorder %s388, %s389
      %p398 = scmp.eq.s32.totalorder %s42, 0
      %p399 = por %p397, %p398
      %p400 = scmp.ne.s32.totalorder %s388, %s389
      %p401 = scmp.eq.s32.totalorder %s43, 1
      %p402 = por %p400, %p401
      %p404 = scmp.ne.s32.totalorder %s389, %s403
      %p405 = scmp.eq.s32.totalorder %s43, 0
      %p406 = por %p404, %p405
      %s407 = ssub.s32 %s37, %s44
      %p408 = scmp.eq.s32.totalorder %s407, 0
      %s410 = sadd.s32 %s409, 1
      %s411 = scalar_select %p408, %s409, %s410
      %p414 = pneg %p408
      %p415 = scmp.eq.s32.totalorder %s37, 1
      %p416 = por %p414, %p415
      %p417 = scmp.ne.s32.totalorder %s409, %s412
      %p418 = scmp.eq.s32.totalorder %s37, 0
      %p419 = por %p417, %p418
      %p420 = scmp.ne.s32.totalorder %s409, %s412
      %p421 = scmp.eq.s32.totalorder %s42, 1
      %p422 = por %p420, %p421
      %p423 = scmp.ne.s32.totalorder %s412, %s413
      %p424 = scmp.eq.s32.totalorder %s42, 0
      %p425 = por %p423, %p424
      %p426 = scmp.ne.s32.totalorder %s412, %s413
      %p427 = scmp.eq.s32.totalorder %s43, 1
      %p428 = por %p426, %p427
      %p430 = scmp.ne.s32.totalorder %s413, %s429
      %p431 = scmp.eq.s32.totalorder %s43, 0
      %p432 = por %p430, %p431
      %s433 = ssub.s32 %s37, %s44
      %p434 = scmp.eq.s32.totalorder %s433, 0
      %s436 = sadd.s32 %s435, 1
      %s437 = scalar_select %p434, %s435, %s436
      %p440 = pneg %p434
      %p441 = scmp.eq.s32.totalorder %s37, 1
      %p442 = por %p440, %p441
      %p443 = scmp.ne.s32.totalorder %s435, %s438
      %p444 = scmp.eq.s32.totalorder %s37, 0
      %p445 = por %p443, %p444
      %p446 = scmp.ne.s32.totalorder %s435, %s438
      %p447 = scmp.eq.s32.totalorder %s42, 1
      %p448 = por %p446, %p447
      %p449 = scmp.ne.s32.totalorder %s438, %s439
      %p450 = scmp.eq.s32.totalorder %s42, 0
      %p451 = por %p449, %p450
      %p452 = scmp.ne.s32.totalorder %s438, %s439
      %p453 = scmp.eq.s32.totalorder %s43, 1
      %p454 = por %p452, %p453
      %p456 = scmp.ne.s32.totalorder %s439, %s455
      %p457 = scmp.eq.s32.totalorder %s43, 0
      %p458 = por %p456, %p457
      %p459 = scmp.le.s32.totalorder 1, %s37
      %p460 = scmp.lt.s32.totalorder %s37, 3
      %p461 = pnand %p459, %p460
      %p462 = pneg %p461
      // Predicated region
      $region9: #{encoder_block.1} parent=5 // pred_check
        _
      $region10: #{encoder_block.1} parent=5 // pred_check_branch
        %464 = sbr.rel (%p461) target = $region12
      $region11: #{encoder_block.1} parent=5 // pred_region
        %s465 = ssub.s32 %s37, 1
        // Predicated region
        $region13: #{encoder_block.1} parent=11 // pred_check
          %p466 = pneg %p84
        $region14: #{encoder_block.1} parent=11 // pred_check_branch
          %468 = sbr.rel (%p466) target = $region16
        $region15: #{encoder_block.1} parent=11 // pred_region
          _
        $region16: #{encoder_block.1} parent=11 // pred_fallthru
          _
        // Predicated region
        $region17: #{encoder_block.1} parent=11 // pred_check
          %p469 = pneg %p105
        $region18: #{encoder_block.1} parent=11 // pred_check_branch
          %471 = sbr.rel (%p469) target = $region20
        $region19: #{encoder_block.1} parent=11 // pred_region
          _
        $region20: #{encoder_block.1} parent=11 // pred_fallthru
          _
        // Predicated region
        $region21: #{encoder_block.1} parent=11 // pred_check
          %p472 = pneg %p126
        $region22: #{encoder_block.1} parent=11 // pred_check_branch
          %474 = sbr.rel (%p472) target = $region24
        $region23: #{encoder_block.1} parent=11 // pred_region
          _
        $region24: #{encoder_block.1} parent=11 // pred_fallthru
          _
        // Predicated region
        $region25: #{encoder_block.1} parent=11 // pred_check
          %p475 = pneg %p147
        $region26: #{encoder_block.1} parent=11 // pred_check_branch
          %477 = sbr.rel (%p475) target = $region28
        $region27: #{encoder_block.1} parent=11 // pred_region
          %s479 = ssub.s32 16, 16
          %480 = vsyncadd [#allocation3], %s479
          %s482 = sshll.u32 [#allocation2], 4
          %s483 = int_to_ptr.vmem [resolvable:$true] %s482
          %485 = dma.hbm_to_vmem [thread:$0]  %s4, 16, %s483, [#allocation3]
        $region28: #{encoder_block.1} parent=11 // pred_fallthru
          _
        // Predicated region
        $region29: #{encoder_block.1} parent=11 // pred_check
          %p486 = pneg %p168
        $region30: #{encoder_block.1} parent=11 // pred_check_branch
          %488 = sbr.rel (%p486) target = $region32
        $region31: #{encoder_block.1} parent=11 // pred_region
          _
        $region32: #{encoder_block.1} parent=11 // pred_fallthru
          _
        // Predicated region
        $region33: #{encoder_block.1} parent=11 // pred_check
          %p489 = pneg %p189
        $region34: #{encoder_block.1} parent=11 // pred_check_branch
          %491 = sbr.rel (%p489) target = $region36
        $region35: #{encoder_block.1} parent=11 // pred_region
          %s493 = ssub.s32 16, 16
          %494 = vsyncadd [#allocation6], %s493
          %s496 = sshll.u32 [#allocation5], 4
          %s497 = int_to_ptr.vmem [resolvable:$true] %s496
          %499 = dma.hbm_to_vmem [thread:$0]  %s6, 16, %s497, [#allocation6]
        $region36: #{encoder_block.1} parent=11 // pred_fallthru
          _
        // Predicated region
        $region37: #{encoder_block.1} parent=11 // pred_check
          %p500 = pneg %p210
        $region38: #{encoder_block.1} parent=11 // pred_check_branch
          %502 = sbr.rel (%p500) target = $region40
        $region39: #{encoder_block.1} parent=11 // pred_region
          _
        $region40: #{encoder_block.1} parent=11 // pred_fallthru
          _
        // Predicated region
        $region41: #{encoder_block.1} parent=11 // pred_check
          %p503 = pneg %p231
        $region42: #{encoder_block.1} parent=11 // pred_check_branch
          %505 = sbr.rel (%p503) target = $region44
        $region43: #{encoder_block.1} parent=11 // pred_region
          %s507 = ssub.s32 16, 16
          %508 = vsyncadd [#allocation6], %s507
          %s510 = sshll.u32 [#allocation7], 4
          %s511 = int_to_ptr.vmem [resolvable:$true] %s510
          %513 = dma.hbm_to_vmem [thread:$0]  %s8, 16, %s511, [#allocation6]
        $region44: #{encoder_block.1} parent=11 // pred_fallthru
          _
        // Predicated region
        $region45: #{encoder_block.1} parent=11 // pred_check
          %p514 = pneg %p252
        $region46: #{encoder_block.1} parent=11 // pred_check_branch
          %516 = sbr.rel (%p514) target = $region48
        $region47: #{encoder_block.1} parent=11 // pred_region
          %s518 = ssub.s32 16, 16
          %519 = vsyncadd [#allocation9], %s518
          %s521 = sshll.u32 [#allocation8], 4
          %s522 = int_to_ptr.vmem [resolvable:$true] %s521
          %524 = dma.hbm_to_vmem [thread:$0]  %s9, 16, %s522, [#allocation9]
        $region48: #{encoder_block.1} parent=11 // pred_fallthru
          _
        // Predicated region
        $region49: #{encoder_block.1} parent=11 // pred_check
          %p525 = pneg %p273
        $region50: #{encoder_block.1} parent=11 // pred_check_branch
          %527 = sbr.rel (%p525) target = $region52
        $region51: #{encoder_block.1} parent=11 // pred_region
          %s529 = ssub.s32 16, 16
          %530 = vsyncadd [#allocation9], %s529
          %s532 = sshll.u32 [#allocation10], 4
          %s533 = int_to_ptr.vmem [resolvable:$true] %s532
          %535 = dma.hbm_to_vmem [thread:$0]  %s10, 16, %s533, [#allocation9]
        $region52: #{encoder_block.1} parent=11 // pred_fallthru
          _
        // Predicated region
        $region53: #{encoder_block.1} parent=11 // pred_check
          %p536 = pneg %p294
        $region54: #{encoder_block.1} parent=11 // pred_check_branch
          %538 = sbr.rel (%p536) target = $region56
        $region55: #{encoder_block.1} parent=11 // pred_region
          %s540 = ssub.s32 256, 256
          %541 = vsyncadd [#allocation12], %s540
          %s542 = sshll.u32 [#allocation11], 4
          %s543 = int_to_ptr.vmem [resolvable:$true] %s542
          %548 = dma.hbm_to_vmem [thread:$0]  %s11, 256, %s543, [#allocation12], 64, 64, 4
        $region56: #{encoder_block.1} parent=11 // pred_fallthru
          _
        // Predicated region
        $region57: #{encoder_block.1} parent=11 // pred_check
          %p549 = pneg %p315
        $region58: #{encoder_block.1} parent=11 // pred_check_branch
          %551 = sbr.rel (%p549) target = $region60
        $region59: #{encoder_block.1} parent=11 // pred_region
          %s553 = ssub.s32 16, 16
          %554 = vsyncadd [#allocation12], %s553
          %s556 = sshll.u32 [#allocation13], 4
          %s557 = int_to_ptr.vmem [resolvable:$true] %s556
          %559 = dma.hbm_to_vmem [thread:$0]  %s12, 16, %s557, [#allocation12]
        $region60: #{encoder_block.1} parent=11 // pred_fallthru
          _
        // Predicated region
        $region61: #{encoder_block.1} parent=11 // pred_check
          %p560 = pneg %p336
        $region62: #{encoder_block.1} parent=11 // pred_check_branch
          %562 = sbr.rel (%p560) target = $region64
        $region63: #{encoder_block.1} parent=11 // pred_region
          _
        $region64: #{encoder_block.1} parent=11 // pred_fallthru
          _
        // Predicated region
        $region65: #{encoder_block.1} parent=11 // pred_check
          %p563 = pneg %p357
        $region66: #{encoder_block.1} parent=11 // pred_check_branch
          %565 = sbr.rel (%p563) target = $region68
        $region67: #{encoder_block.1} parent=11 // pred_region
          %s567 = ssub.s32 16, 16
          %568 = vsyncadd [#allocation15], %s567
          %s570 = sshll.u32 [#allocation14], 4
          %s571 = int_to_ptr.vmem [resolvable:$true] %s570
          %573 = dma.hbm_to_vmem [thread:$0]  %s14, 16, %s571, [#allocation15]
        $region68: #{encoder_block.1} parent=11 // pred_fallthru
          _
        // Predicated region
        $region69: #{encoder_block.1} parent=11 // pred_check
          %p574 = pneg %p378
        $region70: #{encoder_block.1} parent=11 // pred_check_branch
          %576 = sbr.rel (%p574) target = $region72
        $region71: #{encoder_block.1} parent=11 // pred_region
          %s578 = ssub.s32 16, 16
          %579 = vsyncadd [#allocation15], %s578
          %s581 = sshll.u32 [#allocation16], 4
          %s582 = int_to_ptr.vmem [resolvable:$true] %s581
          %584 = dma.hbm_to_vmem [thread:$0]  %s15, 16, %s582, [#allocation15]
        $region72: #{encoder_block.1} parent=11 // pred_fallthru
          _
        // Predicated region
        $region73: #{encoder_block.1} parent=11 // pred_check
          %p585 = pneg %p399
        $region74: #{encoder_block.1} parent=11 // pred_check_branch
          %587 = sbr.rel (%p585) target = $region76
        $region75: #{encoder_block.1} parent=11 // pred_region
          %s589 = ssub.s32 16, 16
          %590 = vsyncadd [#allocation18], %s589
          %s592 = sshll.u32 [#allocation17], 4
          %s593 = int_to_ptr.vmem [resolvable:$true] %s592
          %595 = dma.hbm_to_vmem [thread:$0]  %s16, 16, %s593, [#allocation18]
        $region76: #{encoder_block.1} parent=11 // pred_fallthru
          _
      $region12: #{encoder_block.1} parent=5 // pred_fallthru
        _
      %p596 = scmp.lt.s32.totalorder %s37, 2
      // Predicated region
      $region77: #{encoder_block.1} parent=5 // pred_check
        %p597 = pneg %p596
      $region78: #{encoder_block.1} parent=5 // pred_check_branch
        %599 = sbr.rel (%p597) target = $region80
      $region79: #{encoder_block.1} parent=5 // pred_region
        // Predicated region
        $region81: #{encoder_block.1} parent=79 // pred_check
          %p600 = pneg %p57
        $region82: #{encoder_block.1} parent=79 // pred_check_branch
          %602 = sbr.rel (%p600) target = $region84
        $region83: #{encoder_block.1} parent=79 // pred_region
          %p603 = scmp.lt.s32.totalorder %s37, 1
          %s604 = scalar_select %p603, %s37, 1
          %s605 = smul.addr %s604, 8
          %s606 = scalar_lea.vmem %s0, %s605
        $region84: #{encoder_block.1} parent=79 // pred_fallthru
          _
      $region80: #{encoder_block.1} parent=5 // pred_fallthru
        _
      %p607 = scmp.le.s32.totalorder 1, %s37
      %p608 = scmp.lt.s32.totalorder %s37, 3
      %p609 = pnand %p607, %p608
      %p610 = pneg %p609
      // Predicated region
      $region85: #{encoder_block.1} parent=5 // pred_check
        _
      $region86: #{encoder_block.1} parent=5 // pred_check_branch
        %612 = sbr.rel (%p609) target = $region88
      $region87: #{encoder_block.1} parent=5 // pred_region
        %s613 = ssub.s32 %s37, 1
        // Predicated region
        $region89: #{encoder_block.1} parent=87 // pred_check
          %p614 = pneg %p147
        $region90: #{encoder_block.1} parent=87 // pred_check_branch
          %616 = sbr.rel (%p614) target = $region92
        $region91: #{encoder_block.1} parent=87 // pred_region
          %617 = dma.done [#allocation3], 16
        $region92: #{encoder_block.1} parent=87 // pred_fallthru
          _
        // Predicated region
        $region93: #{encoder_block.1} parent=87 // pred_check
          %p618 = pneg %p189
        $region94: #{encoder_block.1} parent=87 // pred_check_branch
          %620 = sbr.rel (%p618) target = $region96
        $region95: #{encoder_block.1} parent=87 // pred_region
          %621 = dma.done [#allocation6], 16
        $region96: #{encoder_block.1} parent=87 // pred_fallthru
          _
        // Predicated region
        $region97: #{encoder_block.1} parent=87 // pred_check
          %p622 = pneg %p231
        $region98: #{encoder_block.1} parent=87 // pred_check_branch
          %624 = sbr.rel (%p622) target = $region100
        $region99: #{encoder_block.1} parent=87 // pred_region
          %625 = dma.done [#allocation6], 16
        $region100: #{encoder_block.1} parent=87 // pred_fallthru
          _
        // Predicated region
        $region101: #{encoder_block.1} parent=87 // pred_check
          %p626 = pneg %p252
        $region102: #{encoder_block.1} parent=87 // pred_check_branch
          %628 = sbr.rel (%p626) target = $region104
        $region103: #{encoder_block.1} parent=87 // pred_region
          %629 = dma.done [#allocation9], 16
        $region104: #{encoder_block.1} parent=87 // pred_fallthru
          _
        // Predicated region
        $region105: #{encoder_block.1} parent=87 // pred_check
          %p630 = pneg %p273
        $region106: #{encoder_block.1} parent=87 // pred_check_branch
          %632 = sbr.rel (%p630) target = $region108
        $region107: #{encoder_block.1} parent=87 // pred_region
          %633 = dma.done [#allocation9], 16
        $region108: #{encoder_block.1} parent=87 // pred_fallthru
          _
        // Predicated region
        $region109: #{encoder_block.1} parent=87 // pred_check
          %p634 = pneg %p294
        $region110: #{encoder_block.1} parent=87 // pred_check_branch
          %636 = sbr.rel (%p634) target = $region112
        $region111: #{encoder_block.1} parent=87 // pred_region
          %637 = dma.done [#allocation12], 256
        $region112: #{encoder_block.1} parent=87 // pred_fallthru
          _
        // Predicated region
        $region113: #{encoder_block.1} parent=87 // pred_check
          %p638 = pneg %p315
        $region114: #{encoder_block.1} parent=87 // pred_check_branch
          %640 = sbr.rel (%p638) target = $region116
        $region115: #{encoder_block.1} parent=87 // pred_region
          %641 = dma.done [#allocation12], 16
        $region116: #{encoder_block.1} parent=87 // pred_fallthru
          _
        // Predicated region
        $region117: #{encoder_block.1} parent=87 // pred_check
          %p642 = pneg %p357
        $region118: #{encoder_block.1} parent=87 // pred_check_branch
          %644 = sbr.rel (%p642) target = $region120
        $region119: #{encoder_block.1} parent=87 // pred_region
          %645 = dma.done [#allocation15], 16
        $region120: #{encoder_block.1} parent=87 // pred_fallthru
          _
        // Predicated region
        $region121: #{encoder_block.1} parent=87 // pred_check
          %p646 = pneg %p378
        $region122: #{encoder_block.1} parent=87 // pred_check_branch
          %648 = sbr.rel (%p646) target = $region124
        $region123: #{encoder_block.1} parent=87 // pred_region
          %649 = dma.done [#allocation15], 16
        $region124: #{encoder_block.1} parent=87 // pred_fallthru
          _
        // Predicated region
        $region125: #{encoder_block.1} parent=87 // pred_check
          %p650 = pneg %p399
        $region126: #{encoder_block.1} parent=87 // pred_check_branch
          %652 = sbr.rel (%p650) target = $region128
        $region127: #{encoder_block.1} parent=87 // pred_region
          %653 = dma.done [#allocation18], 16
        $region128: #{encoder_block.1} parent=87 // pred_fallthru
          _
        %p654 = scmp.lt.s32.totalorder %s42, 1
        %s655 = scalar_select %p654, %s42, 1
        %s656 = smul.addr %s655, 8
        %s657 = scalar_lea.vmem %s0, %s656
        %p658 = pneg %p63
        %p659 = pneg %p60
        %p660 = pneg %p84
        %p661 = pneg %p81
        %p662 = pneg %p105
        %p663 = pneg %p102
        %p664 = pneg %p126
        %p665 = pneg %p123
        %p666 = pneg %p147
        %p667 = pneg %p144
        %p668 = pneg %p168
        %p669 = pneg %p165
        %p670 = pneg %p189
        %p671 = pneg %p186
        %p672 = pneg %p210
        %p673 = pneg %p207
        %p674 = pneg %p231
        %p675 = pneg %p228
        %p676 = pneg %p252
        %p677 = pneg %p249
        %p678 = pneg %p273
        %p679 = pneg %p270
        %p680 = pneg %p294
        %p681 = pneg %p291
        %p682 = pneg %p315
        %p683 = pneg %p312
        %p684 = pneg %p336
        %p685 = pneg %p333
        %p686 = pneg %p357
        %p687 = pneg %p354
        %p688 = pneg %p378
        %p689 = pneg %p375
        %p690 = pneg %p399
        %p691 = pneg %p396
        %p692 = pneg %p425
        %p693 = pneg %p422
        %s694 = sand.u32 %s412, 1
        %s695 = scalar_lea.sflag [#allocation4], %s694
        %s696 = sand.u32 %s412, 1
        %s697 = smul.addr %s696, 8
        %s698 = scalar_lea.vmem [#allocation19], %s697
        %p699 = pneg %p451
        %p700 = pneg %p448
        %s701 = sand.u32 %s438, 1
        %s702 = scalar_lea.sflag [#allocation21], %s701
        %s703 = sand.u32 %s438, 1
        %s704 = smul.addr %s703, 32
        %s705 = scalar_lea.vmem [#allocation20], %s704
        %p706 = scmp.lt.s32.totalorder %s42, 1
        %s707 = scalar_select %p706, %s42, 1
        %s708 = smul.addr %s707, 8
        %s709 = scalar_lea.vmem %s0, %s708
        %v711 = vld [vmem:[%s709] sm:$0xff]
        %v712 = vpack.c.bf16 %v711, %v711
        %v713 = vld [vmem:[%s1] sm:$0xf]
        %v714 = vld [vmem:[%s1 + $0x4] sm:$0xf]
        %v715 = vld [vmem:[%s1 + $0x8] sm:$0xf]
        %v716 = vld [vmem:[%s1 + $0xc] sm:$0xf]
        %v717 = vld [vmem:[%s2] sm:$0x1]
        %v719 = vlaneseq
        %v720 = vshrl.u32 %v719, 7
        %v721 = vsub.s32 0, %v720
        %v722 = vrot.slane %v717, %v721
        %v728 = vunpack.c.l.b16 %v713
        %v729 = vunpack.c.l.b16 %v714
        %v730 = vunpack.c.l.b16 %v715
        %v731 = vunpack.c.l.b16 %v716
        %v732 = vpack.c.b16 %v729, %v728
        %v733 = vpack.c.b16 %v731, %v730
        %vm736 = vcmask 261120
        %v738 = vsel %vm736, %v712, 0
        %740 = vmatprep.subr.bf16.mxu0 0
        %741 = vmatpush1.bf16.msra.mxu0 %v732
        %742 = vmatprep.subr.bf16.mxu0 0
        %743 = vmatpush1.bf16.msra.mxu0 %v733
        %744 = vmatprep.subr.bf16.mxu0 0
        %745 = vmatpush1.bf16.msra.mxu0 0
        %746 = vmatprep.subr.bf16.mxu0 0
        %747 = vmatpush1.bf16.msra.mxu0 0
        %748 = vmatprep.subr.bf16.mxu0 0
        %749 = vmatpush1.bf16.msra.mxu0 0
        %750 = vmatprep.subr.bf16.mxu0 0
        %751 = vmatpush1.bf16.msra.mxu0 0
        %752 = vmatprep.subr.bf16.mxu0 0
        %753 = vmatpush1.bf16.msra.mxu0 0
        %754 = vmatprep.subr.bf16.mxu0 0
        %755 = vmatpush1.bf16.msra.mxu0 0
        %756 = vmatprep.subr.bf16.mxu0 0
        %757 = vmatpush1.bf16.msra.mxu0 0
        %758 = vmatprep.subr.bf16.mxu0 0
        %759 = vmatpush1.bf16.msra.mxu0 0
        %760 = vmatprep.subr.bf16.mxu0 0
        %761 = vmatpush1.bf16.msra.mxu0 0
        %762 = vmatprep.subr.bf16.mxu0 0
        %763 = vmatpush1.bf16.msra.mxu0 0
        %764 = vmatprep.subr.bf16.mxu0 0
        %765 = vmatpush1.bf16.msra.mxu0 0
        %766 = vmatprep.subr.bf16.mxu0 0
        %767 = vmatpush1.bf16.msra.mxu0 0
        %768 = vmatprep.subr.bf16.mxu0 0
        %769 = vmatpush1.bf16.msra.mxu0 0
        %770 = vmatprep.subr.bf16.mxu0 0
        %771 = vmatpush1.bf16.msra.mxu0 0
        %772 = vmatprep.mubr.bf16.mxu0 0
        %773 = vmatmul.mubr.bf16.gmra.mrb[0].mxu0 %v738
        %v774 = vpop.f32.mrb[0].mxu0
        %v775 = vadd.f32 %v722, %v774
        %v776 = vpop.f32.mrb[0].mxu0
        %v777 = vpop.f32.mrb[0].mxu0
        %v778 = vpop.f32.mrb[0].mxu0
        %779 = vdwg.mxu0
        %v780 = vld [vmem:[%s3] sm:$0xf]
        %v781 = vld [vmem:[%s3 + $0x4] sm:$0xf]
        %v782 = vld [vmem:[%s3 + $0x8] sm:$0xf]
        %v783 = vld [vmem:[%s3 + $0xc] sm:$0xf]
        %v784 = vld [vmem:[#allocation2] sm:$0x1]
        %v786 = vlaneseq
        %v787 = vshrl.u32 %v786, 7
        %v788 = vsub.s32 0, %v787
        %v789 = vrot.slane %v784, %v788
        %v795 = vunpack.c.l.b16 %v780
        %v796 = vunpack.c.l.b16 %v781
        %v797 = vunpack.c.l.b16 %v782
        %v798 = vunpack.c.l.b16 %v783
        %v799 = vpack.c.b16 %v796, %v795
        %v800 = vpack.c.b16 %v798, %v797
        %803 = vmatprep.subr.bf16.mxu0 0
        %804 = vmatpush1.bf16.msra.mxu0 %v799
        %805 = vmatprep.subr.bf16.mxu0 0
        %806 = vmatpush1.bf16.msra.mxu0 %v800
        %807 = vmatprep.subr.bf16.mxu0 0
        %808 = vmatpush1.bf16.msra.mxu0 0
        %809 = vmatprep.subr.bf16.mxu0 0
        %810 = vmatpush1.bf16.msra.mxu0 0
        %811 = vmatprep.subr.bf16.mxu0 0
        %812 = vmatpush1.bf16.msra.mxu0 0
        %813 = vmatprep.subr.bf16.mxu0 0
        %814 = vmatpush1.bf16.msra.mxu0 0
        %815 = vmatprep.subr.bf16.mxu0 0
        %816 = vmatpush1.bf16.msra.mxu0 0
        %817 = vmatprep.subr.bf16.mxu0 0
        %818 = vmatpush1.bf16.msra.mxu0 0
        %819 = vmatprep.subr.bf16.mxu0 0
        %820 = vmatpush1.bf16.msra.mxu0 0
        %821 = vmatprep.subr.bf16.mxu0 0
        %822 = vmatpush1.bf16.msra.mxu0 0
        %823 = vmatprep.subr.bf16.mxu0 0
        %824 = vmatpush1.bf16.msra.mxu0 0
        %825 = vmatprep.subr.bf16.mxu0 0
        %826 = vmatpush1.bf16.msra.mxu0 0
        %827 = vmatprep.subr.bf16.mxu0 0
        %828 = vmatpush1.bf16.msra.mxu0 0
        %829 = vmatprep.subr.bf16.mxu0 0
        %830 = vmatpush1.bf16.msra.mxu0 0
        %831 = vmatprep.subr.bf16.mxu0 0
        %832 = vmatpush1.bf16.msra.mxu0 0
        %833 = vmatprep.subr.bf16.mxu0 0
        %834 = vmatpush1.bf16.msra.mxu0 0
        %835 = vmatprep.mubr.bf16.mxu0 0
        %836 = vmatmul.mubr.bf16.gmra.mrb[0].mxu0 %v738
        %v837 = vpop.f32.mrb[0].mxu0
        %v838 = vadd.f32 %v789, %v837
        %v839 = vpop.f32.mrb[0].mxu0
        %v840 = vpop.f32.mrb[0].mxu0
        %v841 = vpop.f32.mrb[0].mxu0
        %842 = vdwg.mxu0
        %v843 = vld [vmem:[%s5] sm:$0xf]
        %v844 = vld [vmem:[%s5 + $0x4] sm:$0xf]
        %v845 = vld [vmem:[%s5 + $0x8] sm:$0xf]
        %v846 = vld [vmem:[%s5 + $0xc] sm:$0xf]
        %v847 = vld [vmem:[#allocation5] sm:$0x1]
        %v849 = vlaneseq
        %v850 = vshrl.u32 %v849, 7
        %v851 = vsub.s32 0, %v850
        %v852 = vrot.slane %v847, %v851
        %v858 = vunpack.c.l.b16 %v843
        %v859 = vunpack.c.l.b16 %v844
        %v860 = vunpack.c.l.b16 %v845
        %v861 = vunpack.c.l.b16 %v846
        %v862 = vpack.c.b16 %v859, %v858
        %v863 = vpack.c.b16 %v861, %v860
        %866 = vmatprep.subr.bf16.mxu0 0
        %867 = vmatpush1.bf16.msra.mxu0 %v862
        %868 = vmatprep.subr.bf16.mxu0 0
        %869 = vmatpush1.bf16.msra.mxu0 %v863
        %870 = vmatprep.subr.bf16.mxu0 0
        %871 = vmatpush1.bf16.msra.mxu0 0
        %872 = vmatprep.subr.bf16.mxu0 0
        %873 = vmatpush1.bf16.msra.mxu0 0
        %874 = vmatprep.subr.bf16.mxu0 0
        %875 = vmatpush1.bf16.msra.mxu0 0
        %876 = vmatprep.subr.bf16.mxu0 0
        %877 = vmatpush1.bf16.msra.mxu0 0
        %878 = vmatprep.subr.bf16.mxu0 0
        %879 = vmatpush1.bf16.msra.mxu0 0
        %880 = vmatprep.subr.bf16.mxu0 0
        %881 = vmatpush1.bf16.msra.mxu0 0
        %882 = vmatprep.subr.bf16.mxu0 0
        %883 = vmatpush1.bf16.msra.mxu0 0
        %884 = vmatprep.subr.bf16.mxu0 0
        %885 = vmatpush1.bf16.msra.mxu0 0
        %886 = vmatprep.subr.bf16.mxu0 0
        %887 = vmatpush1.bf16.msra.mxu0 0
        %888 = vmatprep.subr.bf16.mxu0 0
        %889 = vmatpush1.bf16.msra.mxu0 0
        %890 = vmatprep.subr.bf16.mxu0 0
        %891 = vmatpush1.bf16.msra.mxu0 0
        %892 = vmatprep.subr.bf16.mxu0 0
        %893 = vmatpush1.bf16.msra.mxu0 0
        %894 = vmatprep.subr.bf16.mxu0 0
        %895 = vmatpush1.bf16.msra.mxu0 0
        %896 = vmatprep.subr.bf16.mxu0 0
        %897 = vmatpush1.bf16.msra.mxu0 0
        %898 = vmatprep.mubr.bf16.mxu0 0
        %899 = vmatmul.mubr.bf16.gmra.mrb[0].mxu0 %v738
        %v900 = vpop.f32.mrb[0].mxu0
        %v901 = vadd.f32 %v852, %v900
        %v902 = vpop.f32.mrb[0].mxu0
        %v903 = vpop.f32.mrb[0].mxu0
        %v904 = vpop.f32.mrb[0].mxu0
        %905 = vdwg.mxu0
        %v906 = vpack.c.bf16 %v775, %v775
        %v907 = vpack.c.bf16 %v838, %v838
        %v908 = vpack.c.bf16 %v901, %v901
        %vm909 = vcmask 64512
        %v911 = vsel %vm909, %v906, 0
        %v914 = vsel %vm909, %v907, 0
        %916 = vmatprep.subr.bf16.mxu0 0
        %917 = vmatpush1.bf16.xpose.msra.mxu0 %v914
        %918 = vmatprep.subr.bf16.mxu0 0
        %919 = vmatpush1.bf16.xpose.msra.mxu0 0
        %920 = vmatprep.subr.bf16.mxu0 0
        %921 = vmatpush1.bf16.xpose.msra.mxu0 0
        %922 = vmatprep.subr.bf16.mxu0 0
        %923 = vmatpush1.bf16.xpose.msra.mxu0 0
        %924 = vmatprep.subr.bf16.mxu0 0
        %925 = vmatpush1.bf16.xpose.msra.mxu0 0
        %926 = vmatprep.subr.bf16.mxu0 0
        %927 = vmatpush1.bf16.xpose.msra.mxu0 0
        %928 = vmatprep.subr.bf16.mxu0 0
        %929 = vmatpush1.bf16.xpose.msra.mxu0 0
        %930 = vmatprep.subr.bf16.mxu0 0
        %931 = vmatpush1.bf16.xpose.msra.mxu0 0
        %932 = vmatprep.subr.bf16.mxu0 0
        %933 = vmatpush1.bf16.xpose.msra.mxu0 0
        %934 = vmatprep.subr.bf16.mxu0 0
        %935 = vmatpush1.bf16.xpose.msra.mxu0 0
        %936 = vmatprep.subr.bf16.mxu0 0
        %937 = vmatpush1.bf16.xpose.msra.mxu0 0
        %938 = vmatprep.subr.bf16.mxu0 0
        %939 = vmatpush1.bf16.xpose.msra.mxu0 0
        %940 = vmatprep.subr.bf16.mxu0 0
        %941 = vmatpush1.bf16.xpose.msra.mxu0 0
        %942 = vmatprep.subr.bf16.mxu0 0
        %943 = vmatpush1.bf16.xpose.msra.mxu0 0
        %944 = vmatprep.subr.bf16.mxu0 0
        %945 = vmatpush1.bf16.xpose.msra.mxu0 0
        %946 = vmatprep.subr.bf16.mxu0 0
        %947 = vmatpush1.bf16.xpose.msra.mxu0 0
        %948 = vmatprep.mubr.bf16.mxu0 0
        %949 = vmatmul.mubr.bf16.gmra.mrb[0].mxu0 %v911
        %v950 = vpop.f32.mrb[0].mxu0
        %v951 = vadd.f32 0.0, %v950
        %v952 = vpop.f32.mrb[0].mxu0
        %v953 = vpop.f32.mrb[0].mxu0
        %v954 = vpop.f32.mrb[0].mxu0
        %955 = vdwg.mxu0
        %v956 = vmul.f32 %v951, 0.35355338
        %v957 = vsel %vm909, %v956, -inf
        %958 = vmax.xlane.f32.xlu0 %v957
        %v959 = vpop.xlane.xlu0 %958
        %v960 = vsub.f32 %v956, %v959
        %v961 = vmul.f32 %v960, 1.442695
        %v962 = vpow.pop %v961
        %v963 = vsel %vm909, %v962, 0.0
        %964 = vadd.xlane.f32.xlu0 %v963
        %v965 = vpop.xlane.xlu0 %964
        %v966 = vrcp.pop %v965
        %v967 = vmul.f32 %v962, %v966
        %968 = vst.msk [vmem:[%s705] sm:$0xff] %vm909, %v967
        %v969 = vpack.c.bf16 %v967, %v967
        %v971 = vsel %vm909, %v969, 0
        %vm973 = vcmask 1043456
        %v975 = vsel %vm973, %v908, 0
        %977 = vmatprep.subr.bf16.mxu0 0
        %978 = vmatpush1.bf16.msra.mxu0 %v975
        %979 = vmatprep.subr.bf16.mxu0 0
        %980 = vmatpush1.bf16.msra.mxu0 0
        %981 = vmatprep.subr.bf16.mxu0 0
        %982 = vmatpush1.bf16.msra.mxu0 0
        %983 = vmatprep.subr.bf16.mxu0 0
        %984 = vmatpush1.bf16.msra.mxu0 0
        %985 = vmatprep.subr.bf16.mxu0 0
        %986 = vmatpush1.bf16.msra.mxu0 0
        %987 = vmatprep.subr.bf16.mxu0 0
        %988 = vmatpush1.bf16.msra.mxu0 0
        %989 = vmatprep.subr.bf16.mxu0 0
        %990 = vmatpush1.bf16.msra.mxu0 0
        %991 = vmatprep.subr.bf16.mxu0 0
        %992 = vmatpush1.bf16.msra.mxu0 0
        %993 = vmatprep.subr.bf16.mxu0 0
        %994 = vmatpush1.bf16.msra.mxu0 0
        %995 = vmatprep.subr.bf16.mxu0 0
        %996 = vmatpush1.bf16.msra.mxu0 0
        %997 = vmatprep.subr.bf16.mxu0 0
        %998 = vmatpush1.bf16.msra.mxu0 0
        %999 = vmatprep.subr.bf16.mxu0 0
        %1000 = vmatpush1.bf16.msra.mxu0 0
        %1001 = vmatprep.subr.bf16.mxu0 0
        %1002 = vmatpush1.bf16.msra.mxu0 0
        %1003 = vmatprep.subr.bf16.mxu0 0
        %1004 = vmatpush1.bf16.msra.mxu0 0
        %1005 = vmatprep.subr.bf16.mxu0 0
        %1006 = vmatpush1.bf16.msra.mxu0 0
        %1007 = vmatprep.subr.bf16.mxu0 0
        %1008 = vmatpush1.bf16.msra.mxu0 0
        %1009 = vmatprep.mubr.bf16.mxu0 0
        %1010 = vmatmul.mubr.bf16.gmra.mrb[0].mxu0 %v971
        %v1011 = vpop.f32.mrb[0].mxu0
        %v1012 = vadd.f32 0.0, %v1011
        %v1013 = vpop.f32.mrb[0].mxu0
        %v1014 = vpop.f32.mrb[0].mxu0
        %v1015 = vpop.f32.mrb[0].mxu0
        %1016 = vdwg.mxu0
        %1018 = vrot.lane.b32.xlu0 %v906, 120
        %v1019 = vpop.permute.xlu0 %1018
        %1021 = vrot.lane.b32.xlu0 %v907, 120
        %v1022 = vpop.permute.xlu0 %1021
        %v1024 = vsel %vm909, %v1019, 0
        %v1027 = vsel %vm909, %v1022, 0
        %1029 = vmatprep.subr.bf16.mxu0 0
        %1030 = vmatpush1.bf16.xpose.msra.mxu0 %v1027
        %1031 = vmatprep.subr.bf16.mxu0 0
        %1032 = vmatpush1.bf16.xpose.msra.mxu0 0
        %1033 = vmatprep.subr.bf16.mxu0 0
        %1034 = vmatpush1.bf16.xpose.msra.mxu0 0
        %1035 = vmatprep.subr.bf16.mxu0 0
        %1036 = vmatpush1.bf16.xpose.msra.mxu0 0
        %1037 = vmatprep.subr.bf16.mxu0 0
        %1038 = vmatpush1.bf16.xpose.msra.mxu0 0
        %1039 = vmatprep.subr.bf16.mxu0 0
        %1040 = vmatpush1.bf16.xpose.msra.mxu0 0
        %1041 = vmatprep.subr.bf16.mxu0 0
        %1042 = vmatpush1.bf16.xpose.msra.mxu0 0
        %1043 = vmatprep.subr.bf16.mxu0 0
        %1044 = vmatpush1.bf16.xpose.msra.mxu0 0
        %1045 = vmatprep.subr.bf16.mxu0 0
        %1046 = vmatpush1.bf16.xpose.msra.mxu0 0
        %1047 = vmatprep.subr.bf16.mxu0 0
        %1048 = vmatpush1.bf16.xpose.msra.mxu0 0
        %1049 = vmatprep.subr.bf16.mxu0 0
        %1050 = vmatpush1.bf16.xpose.msra.mxu0 0
        %1051 = vmatprep.subr.bf16.mxu0 0
        %1052 = vmatpush1.bf16.xpose.msra.mxu0 0
        %1053 = vmatprep.subr.bf16.mxu0 0
        %1054 = vmatpush1.bf16.xpose.msra.mxu0 0
        %1055 = vmatprep.subr.bf16.mxu0 0
        %1056 = vmatpush1.bf16.xpose.msra.mxu0 0
        %1057 = vmatprep.subr.bf16.mxu0 0
        %1058 = vmatpush1.bf16.xpose.msra.mxu0 0
        %1059 = vmatprep.subr.bf16.mxu0 0
        %1060 = vmatpush1.bf16.xpose.msra.mxu0 0
        %1061 = vmatprep.mubr.bf16.mxu0 0
        %1062 = vmatmul.mubr.bf16.gmra.mrb[0].mxu0 %v1024
        %v1063 = vpop.f32.mrb[0].mxu0
        %v1064 = vadd.f32 0.0, %v1063
        %v1065 = vpop.f32.mrb[0].mxu0
        %v1066 = vpop.f32.mrb[0].mxu0
        %v1067 = vpop.f32.mrb[0].mxu0
        %1068 = vdwg.mxu0
        %v1069 = vmul.f32 %v1064, 0.35355338
        %v1070 = vsel %vm909, %v1069, -inf
        %1071 = vmax.xlane.f32.xlu0 %v1070
        %v1072 = vpop.xlane.xlu0 %1071
        %v1073 = vsub.f32 %v1069, %v1072
        %v1074 = vmul.f32 %v1073, 1.442695
        %v1075 = vpow.pop %v1074
        %v1076 = vsel %vm909, %v1075, 0.0
        %1077 = vadd.xlane.f32.xlu0 %v1076
        %v1078 = vpop.xlane.xlu0 %1077
        %v1079 = vrcp.pop %v1078
        %v1080 = vmul.f32 %v1075, %v1079
        %s1081 = scalar_lea.vmem %s705, 8 [#allocation20]
        %1082 = vst.msk [vmem:[%s1081] sm:$0xff] %vm909, %v1080
        %v1083 = vpack.c.bf16 %v1080, %v1080
        %1085 = vrot.lane.b32.xlu0 %v908, 120
        %v1086 = vpop.permute.xlu0 %1085
        %v1088 = vsel %vm909, %v1083, 0
        %v1091 = vsel %vm973, %v1086, 0
        %1093 = vmatprep.subr.bf16.mxu0 0
        %1094 = vmatpush1.bf16.msra.mxu0 %v1091
        %1095 = vmatprep.subr.bf16.mxu0 0
        %1096 = vmatpush1.bf16.msra.mxu0 0
        %1097 = vmatprep.subr.bf16.mxu0 0
        %1098 = vmatpush1.bf16.msra.mxu0 0
        %1099 = vmatprep.subr.bf16.mxu0 0
        %1100 = vmatpush1.bf16.msra.mxu0 0
        %1101 = vmatprep.subr.bf16.mxu0 0
        %1102 = vmatpush1.bf16.msra.mxu0 0
        %1103 = vmatprep.subr.bf16.mxu0 0
        %1104 = vmatpush1.bf16.msra.mxu0 0
        %1105 = vmatprep.subr.bf16.mxu0 0
        %1106 = vmatpush1.bf16.msra.mxu0 0
        %1107 = vmatprep.subr.bf16.mxu0 0
        %1108 = vmatpush1.bf16.msra.mxu0 0
        %1109 = vmatprep.subr.bf16.mxu0 0
        %1110 = vmatpush1.bf16.msra.mxu0 0
        %1111 = vmatprep.subr.bf16.mxu0 0
        %1112 = vmatpush1.bf16.msra.mxu0 0
        %1113 = vmatprep.subr.bf16.mxu0 0
        %1114 = vmatpush1.bf16.msra.mxu0 0
        %1115 = vmatprep.subr.bf16.mxu0 0
        %1116 = vmatpush1.bf16.msra.mxu0 0
        %1117 = vmatprep.subr.bf16.mxu0 0
        %1118 = vmatpush1.bf16.msra.mxu0 0
        %1119 = vmatprep.subr.bf16.mxu0 0
        %1120 = vmatpush1.bf16.msra.mxu0 0
        %1121 = vmatprep.subr.bf16.mxu0 0
        %1122 = vmatpush1.bf16.msra.mxu0 0
        %1123 = vmatprep.subr.bf16.mxu0 0
        %1124 = vmatpush1.bf16.msra.mxu0 0
        %1125 = vmatprep.mubr.bf16.mxu0 0
        %1126 = vmatmul.mubr.bf16.gmra.mrb[0].mxu0 %v1088
        %v1127 = vpop.f32.mrb[0].mxu0
        %v1128 = vadd.f32 0.0, %v1127
        %v1129 = vpop.f32.mrb[0].mxu0
        %v1130 = vpop.f32.mrb[0].mxu0
        %v1131 = vpop.f32.mrb[0].mxu0
        %1132 = vdwg.mxu0
        %1133 = vrot.lane.b32.xlu0 %v906, 112
        %v1134 = vpop.permute.xlu0 %1133
        %1135 = vrot.lane.b32.xlu0 %v907, 112
        %v1136 = vpop.permute.xlu0 %1135
        %v1138 = vsel %vm909, %v1134, 0
        %v1141 = vsel %vm909, %v1136, 0
        %1143 = vmatprep.subr.bf16.mxu0 0
        %1144 = vmatpush1.bf16.xpose.msra.mxu0 %v1141
        %1145 = vmatprep.subr.bf16.mxu0 0
        %1146 = vmatpush1.bf16.xpose.msra.mxu0 0
        %1147 = vmatprep.subr.bf16.mxu0 0
        %1148 = vmatpush1.bf16.xpose.msra.mxu0 0
        %1149 = vmatprep.subr.bf16.mxu0 0
        %1150 = vmatpush1.bf16.xpose.msra.mxu0 0
        %1151 = vmatprep.subr.bf16.mxu0 0
        %1152 = vmatpush1.bf16.xpose.msra.mxu0 0
        %1153 = vmatprep.subr.bf16.mxu0 0
        %1154 = vmatpush1.bf16.xpose.msra.mxu0 0
        %1155 = vmatprep.subr.bf16.mxu0 0
        %1156 = vmatpush1.bf16.xpose.msra.mxu0 0
        %1157 = vmatprep.subr.bf16.mxu0 0
        %1158 = vmatpush1.bf16.xpose.msra.mxu0 0
        %1159 = vmatprep.subr.bf16.mxu0 0
        %1160 = vmatpush1.bf16.xpose.msra.mxu0 0
        %1161 = vmatprep.subr.bf16.mxu0 0
        %1162 = vmatpush1.bf16.xpose.msra.mxu0 0
        %1163 = vmatprep.subr.bf16.mxu0 0
        %1164 = vmatpush1.bf16.xpose.msra.mxu0 0
        %1165 = vmatprep.subr.bf16.mxu0 0
        %1166 = vmatpush1.bf16.xpose.msra.mxu0 0
        %1167 = vmatprep.subr.bf16.mxu0 0
        %1168 = vmatpush1.bf16.xpose.msra.mxu0 0
        %1169 = vmatprep.subr.bf16.mxu0 0
        %1170 = vmatpush1.bf16.xpose.msra.mxu0 0
        %1171 = vmatprep.subr.bf16.mxu0 0
        %1172 = vmatpush1.bf16.xpose.msra.mxu0 0
        %1173 = vmatprep.subr.bf16.mxu0 0
        %1174 = vmatpush1.bf16.xpose.msra.mxu0 0
        %1175 = vmatprep.mubr.bf16.mxu0 0
        %1176 = vmatmul.mubr.bf16.gmra.mrb[0].mxu0 %v1138
        %v1177 = vpop.f32.mrb[0].mxu0
        %v1178 = vadd.f32 0.0, %v1177
        %v1179 = vpop.f32.mrb[0].mxu0
        %v1180 = vpop.f32.mrb[0].mxu0
        %v1181 = vpop.f32.mrb[0].mxu0
        %1182 = vdwg.mxu0
        %v1183 = vmul.f32 %v1178, 0.35355338
        %v1184 = vsel %vm909, %v1183, -inf
        %1185 = vmax.xlane.f32.xlu0 %v1184
        %v1186 = vpop.xlane.xlu0 %1185
        %v1187 = vsub.f32 %v1183, %v1186
        %v1188 = vmul.f32 %v1187, 1.442695
        %v1189 = vpow.pop %v1188
        %v1190 = vsel %vm909, %v1189, 0.0
        %1191 = vadd.xlane.f32.xlu0 %v1190
        %v1192 = vpop.xlane.xlu0 %1191
        %v1193 = vrcp.pop %v1192
        %v1194 = vmul.f32 %v1189, %v1193
        %s1195 = scalar_lea.vmem %s705, 16 [#allocation20]
        %1196 = vst.msk [vmem:[%s1195] sm:$0xff] %vm909, %v1194
        %v1197 = vpack.c.bf16 %v1194, %v1194
        %1198 = vrot.lane.b32.xlu0 %v908, 112
        %v1199 = vpop.permute.xlu0 %1198
        %v1201 = vsel %vm909, %v1197, 0
        %v1204 = vsel %vm973, %v1199, 0
        %1206 = vmatprep.subr.bf16.mxu0 0
        %1207 = vmatpush1.bf16.msra.mxu0 %v1204
        %1208 = vmatprep.subr.bf16.mxu0 0
        %1209 = vmatpush1.bf16.msra.mxu0 0
        %1210 = vmatprep.subr.bf16.mxu0 0
        %1211 = vmatpush1.bf16.msra.mxu0 0
        %1212 = vmatprep.subr.bf16.mxu0 0
        %1213 = vmatpush1.bf16.msra.mxu0 0
        %1214 = vmatprep.subr.bf16.mxu0 0
        %1215 = vmatpush1.bf16.msra.mxu0 0
        %1216 = vmatprep.subr.bf16.mxu0 0
        %1217 = vmatpush1.bf16.msra.mxu0 0
        %1218 = vmatprep.subr.bf16.mxu0 0
        %1219 = vmatpush1.bf16.msra.mxu0 0
        %1220 = vmatprep.subr.bf16.mxu0 0
        %1221 = vmatpush1.bf16.msra.mxu0 0
        %1222 = vmatprep.subr.bf16.mxu0 0
        %1223 = vmatpush1.bf16.msra.mxu0 0
        %1224 = vmatprep.subr.bf16.mxu0 0
        %1225 = vmatpush1.bf16.msra.mxu0 0
        %1226 = vmatprep.subr.bf16.mxu0 0
        %1227 = vmatpush1.bf16.msra.mxu0 0
        %1228 = vmatprep.subr.bf16.mxu0 0
        %1229 = vmatpush1.bf16.msra.mxu0 0
        %1230 = vmatprep.subr.bf16.mxu0 0
        %1231 = vmatpush1.bf16.msra.mxu0 0
        %1232 = vmatprep.subr.bf16.mxu0 0
        %1233 = vmatpush1.bf16.msra.mxu0 0
        %1234 = vmatprep.subr.bf16.mxu0 0
        %1235 = vmatpush1.bf16.msra.mxu0 0
        %1236 = vmatprep.subr.bf16.mxu0 0
        %1237 = vmatpush1.bf16.msra.mxu0 0
        %1238 = vmatprep.mubr.bf16.mxu0 0
        %1239 = vmatmul.mubr.bf16.gmra.mrb[0].mxu0 %v1201
        %v1240 = vpop.f32.mrb[0].mxu0
        %v1241 = vadd.f32 0.0, %v1240
        %v1242 = vpop.f32.mrb[0].mxu0
        %v1243 = vpop.f32.mrb[0].mxu0
        %v1244 = vpop.f32.mrb[0].mxu0
        %1245 = vdwg.mxu0
        %1246 = vrot.lane.b32.xlu0 %v906, 104
        %v1247 = vpop.permute.xlu0 %1246
        %1248 = vrot.lane.b32.xlu0 %v907, 104
        %v1249 = vpop.permute.xlu0 %1248
        %v1251 = vsel %vm909, %v1247, 0
        %v1254 = vsel %vm909, %v1249, 0
        %1256 = vmatprep.subr.bf16.mxu0 0
        %1257 = vmatpush1.bf16.xpose.msra.mxu0 %v1254
        %1258 = vmatprep.subr.bf16.mxu0 0
        %1259 = vmatpush1.bf16.xpose.msra.mxu0 0
        %1260 = vmatprep.subr.bf16.mxu0 0
        %1261 = vmatpush1.bf16.xpose.msra.mxu0 0
        %1262 = vmatprep.subr.bf16.mxu0 0
        %1263 = vmatpush1.bf16.xpose.msra.mxu0 0
        %1264 = vmatprep.subr.bf16.mxu0 0
        %1265 = vmatpush1.bf16.xpose.msra.mxu0 0
        %1266 = vmatprep.subr.bf16.mxu0 0
        %1267 = vmatpush1.bf16.xpose.msra.mxu0 0
        %1268 = vmatprep.subr.bf16.mxu0 0
        %1269 = vmatpush1.bf16.xpose.msra.mxu0 0
        %1270 = vmatprep.subr.bf16.mxu0 0
        %1271 = vmatpush1.bf16.xpose.msra.mxu0 0
        %1272 = vmatprep.subr.bf16.mxu0 0
        %1273 = vmatpush1.bf16.xpose.msra.mxu0 0
        %1274 = vmatprep.subr.bf16.mxu0 0
        %1275 = vmatpush1.bf16.xpose.msra.mxu0 0
        %1276 = vmatprep.subr.bf16.mxu0 0
        %1277 = vmatpush1.bf16.xpose.msra.mxu0 0
        %1278 = vmatprep.subr.bf16.mxu0 0
        %1279 = vmatpush1.bf16.xpose.msra.mxu0 0
        %1280 = vmatprep.subr.bf16.mxu0 0
        %1281 = vmatpush1.bf16.xpose.msra.mxu0 0
        %1282 = vmatprep.subr.bf16.mxu0 0
        %1283 = vmatpush1.bf16.xpose.msra.mxu0 0
        %1284 = vmatprep.subr.bf16.mxu0 0
        %1285 = vmatpush1.bf16.xpose.msra.mxu0 0
        %1286 = vmatprep.subr.bf16.mxu0 0
        %1287 = vmatpush1.bf16.xpose.msra.mxu0 0
        %1288 = vmatprep.mubr.bf16.mxu0 0
        %1289 = vmatmul.mubr.bf16.gmra.mrb[0].mxu0 %v1251
        %v1290 = vpop.f32.mrb[0].mxu0
        %v1291 = vadd.f32 0.0, %v1290
        %v1292 = vpop.f32.mrb[0].mxu0
        %v1293 = vpop.f32.mrb[0].mxu0
        %v1294 = vpop.f32.mrb[0].mxu0
        %1295 = vdwg.mxu0
        %v1296 = vmul.f32 %v1291, 0.35355338
        %v1297 = vsel %vm909, %v1296, -inf
        %1298 = vmax.xlane.f32.xlu0 %v1297
        %v1299 = vpop.xlane.xlu0 %1298
        %v1300 = vsub.f32 %v1296, %v1299
        %v1301 = vmul.f32 %v1300, 1.442695
        %v1302 = vpow.pop %v1301
        %v1303 = vsel %vm909, %v1302, 0.0
        %1304 = vadd.xlane.f32.xlu0 %v1303
        %v1305 = vpop.xlane.xlu0 %1304
        %v1306 = vrcp.pop %v1305
        %v1307 = vmul.f32 %v1302, %v1306
        %s1308 = scalar_lea.vmem %s705, 24 [#allocation20]
        %1309 = vst.msk [vmem:[%s1308] sm:$0xff] %vm909, %v1307
        %v1310 = vpack.c.bf16 %v1307, %v1307
        %1311 = vrot.lane.b32.xlu0 %v908, 104
        %v1312 = vpop.permute.xlu0 %1311
        %v1314 = vsel %vm909, %v1310, 0
        %v1317 = vsel %vm973, %v1312, 0
        %1319 = vmatprep.subr.bf16.mxu0 0
        %1320 = vmatpush1.bf16.msra.mxu0 %v1317
        %1321 = vmatprep.subr.bf16.mxu0 0
        %1322 = vmatpush1.bf16.msra.mxu0 0
        %1323 = vmatprep.subr.bf16.mxu0 0
        %1324 = vmatpush1.bf16.msra.mxu0 0
        %1325 = vmatprep.subr.bf16.mxu0 0
        %1326 = vmatpush1.bf16.msra.mxu0 0
        %1327 = vmatprep.subr.bf16.mxu0 0
        %1328 = vmatpush1.bf16.msra.mxu0 0
        %1329 = vmatprep.subr.bf16.mxu0 0
        %1330 = vmatpush1.bf16.msra.mxu0 0
        %1331 = vmatprep.subr.bf16.mxu0 0
        %1332 = vmatpush1.bf16.msra.mxu0 0
        %1333 = vmatprep.subr.bf16.mxu0 0
        %1334 = vmatpush1.bf16.msra.mxu0 0
        %1335 = vmatprep.subr.bf16.mxu0 0
        %1336 = vmatpush1.bf16.msra.mxu0 0
        %1337 = vmatprep.subr.bf16.mxu0 0
        %1338 = vmatpush1.bf16.msra.mxu0 0
        %1339 = vmatprep.subr.bf16.mxu0 0
        %1340 = vmatpush1.bf16.msra.mxu0 0
        %1341 = vmatprep.subr.bf16.mxu0 0
        %1342 = vmatpush1.bf16.msra.mxu0 0
        %1343 = vmatprep.subr.bf16.mxu0 0
        %1344 = vmatpush1.bf16.msra.mxu0 0
        %1345 = vmatprep.subr.bf16.mxu0 0
        %1346 = vmatpush1.bf16.msra.mxu0 0
        %1347 = vmatprep.subr.bf16.mxu0 0
        %1348 = vmatpush1.bf16.msra.mxu0 0
        %1349 = vmatprep.subr.bf16.mxu0 0
        %1350 = vmatpush1.bf16.msra.mxu0 0
        %1351 = vmatprep.mubr.bf16.mxu0 0
        %1352 = vmatmul.mubr.bf16.gmra.mrb[0].mxu0 %v1314
        %v1353 = vpop.f32.mrb[0].mxu0
        %v1354 = vadd.f32 0.0, %v1353
        %v1355 = vpop.f32.mrb[0].mxu0
        %v1356 = vpop.f32.mrb[0].mxu0
        %v1357 = vpop.f32.mrb[0].mxu0
        %1358 = vdwg.mxu0
        %1360 = vrot.lane.b32.xlu0 %v1128, 8
        %v1361 = vpop.permute.xlu0 %1360
        %1364 = vrot.lane.b32.xlu0 %v1241, 16
        %v1365 = vpop.permute.xlu0 %1364
        %1368 = vrot.lane.b32.xlu0 %v1354, 24
        %v1369 = vpop.permute.xlu0 %1368
        %v1371 = vsel %vm909, %v1012, %v1361
        %vm1372 = vcmask 130048
        %v1373 = vsel %vm1372, %v1371, %v1365
        %vm1374 = vcmask 195584
        %v1375 = vsel %vm1374, %v1373, %v1369
        %v1376 = vpack.c.bf16 %v1375, %v1375
        %v1377 = vld [vmem:[%s7] sm:$0xf]
        %v1378 = vld [vmem:[%s7 + $0x4] sm:$0xf]
        %v1379 = vld [vmem:[%s7 + $0x8] sm:$0xf]
        %v1380 = vld [vmem:[%s7 + $0xc] sm:$0xf]
        %v1381 = vld [vmem:[#allocation7] sm:$0x1]
        %v1383 = vlaneseq
        %v1384 = vshrl.u32 %v1383, 7
        %v1385 = vsub.s32 0, %v1384
        %v1386 = vrot.slane %v1381, %v1385
        %v1392 = vunpack.c.l.b16 %v1377
        %v1393 = vunpack.c.l.b16 %v1378
        %v1394 = vunpack.c.l.b16 %v1379
        %v1395 = vunpack.c.l.b16 %v1380
        %v1396 = vpack.c.b16 %v1393, %v1392
        %v1397 = vpack.c.b16 %v1395, %v1394
        %v1401 = vsel %vm736, %v1376, 0
        %1403 = vmatprep.subr.bf16.mxu0 0
        %1404 = vmatpush1.bf16.msra.mxu0 %v1396
        %1405 = vmatprep.subr.bf16.mxu0 0
        %1406 = vmatpush1.bf16.msra.mxu0 %v1397
        %1407 = vmatprep.subr.bf16.mxu0 0
        %1408 = vmatpush1.bf16.msra.mxu0 0
        %1409 = vmatprep.subr.bf16.mxu0 0
        %1410 = vmatpush1.bf16.msra.mxu0 0
        %1411 = vmatprep.subr.bf16.mxu0 0
        %1412 = vmatpush1.bf16.msra.mxu0 0
        %1413 = vmatprep.subr.bf16.mxu0 0
        %1414 = vmatpush1.bf16.msra.mxu0 0
        %1415 = vmatprep.subr.bf16.mxu0 0
        %1416 = vmatpush1.bf16.msra.mxu0 0
        %1417 = vmatprep.subr.bf16.mxu0 0
        %1418 = vmatpush1.bf16.msra.mxu0 0
        %1419 = vmatprep.subr.bf16.mxu0 0
        %1420 = vmatpush1.bf16.msra.mxu0 0
        %1421 = vmatprep.subr.bf16.mxu0 0
        %1422 = vmatpush1.bf16.msra.mxu0 0
        %1423 = vmatprep.subr.bf16.mxu0 0
        %1424 = vmatpush1.bf16.msra.mxu0 0
        %1425 = vmatprep.subr.bf16.mxu0 0
        %1426 = vmatpush1.bf16.msra.mxu0 0
        %1427 = vmatprep.subr.bf16.mxu0 0
        %1428 = vmatpush1.bf16.msra.mxu0 0
        %1429 = vmatprep.subr.bf16.mxu0 0
        %1430 = vmatpush1.bf16.msra.mxu0 0
        %1431 = vmatprep.subr.bf16.mxu0 0
        %1432 = vmatpush1.bf16.msra.mxu0 0
        %1433 = vmatprep.subr.bf16.mxu0 0
        %1434 = vmatpush1.bf16.msra.mxu0 0
        %1435 = vmatprep.mubr.bf16.mxu0 0
        %1436 = vmatmul.mubr.bf16.gmra.mrb[0].mxu0 %v1401
        %v1437 = vpop.f32.mrb[0].mxu0
        %v1438 = vadd.f32 %v1386, %v1437
        %v1439 = vpop.f32.mrb[0].mxu0
        %v1440 = vpop.f32.mrb[0].mxu0
        %v1441 = vpop.f32.mrb[0].mxu0
        %1442 = vdwg.mxu0
        %v1443 = vadd.f32 %v1438, %v711
        %v1444 = vsel %vm736, %v1443, 0.0
        %1445 = vadd.xlane.f32.xlu0 %v1444
        %v1446 = vpop.xlane.xlu0 %1445
        %v1447 = vrcp.pop 32.0
        %v1448 = vmul.f32 %v1446, %v1447
        %v1449 = vsub.f32 %v1443, %v1448
        %v1450 = vmul.f32 %v1449, %v1449
        %v1451 = vsel %vm736, %v1450, 0.0
        %1452 = vadd.xlane.f32.xlu0 %v1451
        %v1453 = vpop.xlane.xlu0 %1452
        %v1454 = vmul.f32 %v1453, %v1447
        %v1455 = vadd.f32 %v1454, 1e-05
        %v1456 = vrsqrt.pop %v1455
        %v1457 = vmul.f32 %v1449, %v1456
        %v1458 = vld [vmem:[#allocation8] sm:$0x1]
        %v1460 = vlaneseq
        %v1461 = vshrl.u32 %v1460, 7
        %v1462 = vsub.s32 0, %v1461
        %v1463 = vrot.slane %v1458, %v1462
        %v1465 = vmul.f32 %v1457, %v1463
        %v1466 = vld [vmem:[#allocation10] sm:$0x1]
        %v1468 = vlaneseq
        %v1469 = vshrl.u32 %v1468, 7
        %v1470 = vsub.s32 0, %v1469
        %v1471 = vrot.slane %v1466, %v1470
        %v1473 = vadd.f32 %v1465, %v1471
        %v1474 = vpack.c.bf16 %v1473, %v1473
        %v1475 = vld [vmem:[#allocation11] sm:$0xf]
        %v1476 = vld [vmem:[#allocation11 + $0x4] sm:$0xf]
        %v1477 = vld [vmem:[#allocation11 + $0x8] sm:$0xf]
        %v1478 = vld [vmem:[#allocation11 + $0xc] sm:$0xf]
        %v1479 = vld [vmem:[#allocation13] sm:$0x1]
        %v1481 = vlaneseq
        %v1482 = vshrl.u32 %v1481, 7
        %v1483 = vsub.s32 0, %v1482
        %v1484 = vrot.slane %v1479, %v1483
        %v1490 = vunpack.c.l.b16 %v1475
        %v1491 = vunpack.c.l.b16 %v1476
        %v1492 = vunpack.c.l.b16 %v1477
        %v1493 = vunpack.c.l.b16 %v1478
        %v1494 = vpack.c.b16 %v1491, %v1490
        %v1495 = vpack.c.b16 %v1493, %v1492
        %v1499 = vsel %vm736, %v1474, 0
        %1501 = vmatprep.subr.bf16.mxu0 0
        %1502 = vmatpush1.bf16.msra.mxu0 %v1494
        %1503 = vmatprep.subr.bf16.mxu0 0
        %1504 = vmatpush1.bf16.msra.mxu0 %v1495
        %1505 = vmatprep.subr.bf16.mxu0 0
        %1506 = vmatpush1.bf16.msra.mxu0 0
        %1507 = vmatprep.subr.bf16.mxu0 0
        %1508 = vmatpush1.bf16.msra.mxu0 0
        %1509 = vmatprep.subr.bf16.mxu0 0
        %1510 = vmatpush1.bf16.msra.mxu0 0
        %1511 = vmatprep.subr.bf16.mxu0 0
        %1512 = vmatpush1.bf16.msra.mxu0 0
        %1513 = vmatprep.subr.bf16.mxu0 0
        %1514 = vmatpush1.bf16.msra.mxu0 0
        %1515 = vmatprep.subr.bf16.mxu0 0
        %1516 = vmatpush1.bf16.msra.mxu0 0
        %1517 = vmatprep.subr.bf16.mxu0 0
        %1518 = vmatpush1.bf16.msra.mxu0 0
        %1519 = vmatprep.subr.bf16.mxu0 0
        %1520 = vmatpush1.bf16.msra.mxu0 0
        %1521 = vmatprep.subr.bf16.mxu0 0
        %1522 = vmatpush1.bf16.msra.mxu0 0
        %1523 = vmatprep.subr.bf16.mxu0 0
        %1524 = vmatpush1.bf16.msra.mxu0 0
        %1525 = vmatprep.subr.bf16.mxu0 0
        %1526 = vmatpush1.bf16.msra.mxu0 0
        %1527 = vmatprep.subr.bf16.mxu0 0
        %1528 = vmatpush1.bf16.msra.mxu0 0
        %1529 = vmatprep.subr.bf16.mxu0 0
        %1530 = vmatpush1.bf16.msra.mxu0 0
        %1531 = vmatprep.subr.bf16.mxu0 0
        %1532 = vmatpush1.bf16.msra.mxu0 0
        %1533 = vmatprep.mubr.bf16.mxu0 0
        %1534 = vmatmul.mubr.bf16.gmra.mrb[0].mxu0 %v1499
        %v1535 = vpop.f32.mrb[0].mxu0
        %v1536 = vadd.f32 %v1484, %v1535
        %v1537 = vpop.f32.mrb[0].mxu0
        %v1538 = vpop.f32.mrb[0].mxu0
        %v1539 = vpop.f32.mrb[0].mxu0
        %1540 = vdwg.mxu0
        %v1541 = vmax.f32 %v1536, 0.0
        %v1542 = vpack.c.bf16 %v1541, %v1541
        %v1543 = vld [vmem:[%s13] sm:$0xf]
        %v1544 = vld [vmem:[%s13 + $0x4] sm:$0xf]
        %v1545 = vld [vmem:[%s13 + $0x8] sm:$0xf]
        %v1546 = vld [vmem:[%s13 + $0xc] sm:$0xf]
        %v1547 = vld [vmem:[%s13 + $0x10] sm:$0xf]
        %v1548 = vld [vmem:[%s13 + $0x14] sm:$0xf]
        %v1549 = vld [vmem:[%s13 + $0x18] sm:$0xf]
        %v1550 = vld [vmem:[%s13 + $0x1c] sm:$0xf]
        %v1551 = vld [vmem:[#allocation14] sm:$0x1]
        %v1553 = vlaneseq
        %v1554 = vshrl.u32 %v1553, 7
        %v1555 = vsub.s32 0, %v1554
        %v1556 = vrot.slane %v1551, %v1555
        %v1566 = vunpack.c.l.b16 %v1543
        %v1567 = vunpack.c.l.b16 %v1544
        %v1568 = vunpack.c.l.b16 %v1545
        %v1569 = vunpack.c.l.b16 %v1546
        %v1570 = vunpack.c.l.b16 %v1547
        %v1571 = vunpack.c.l.b16 %v1548
        %v1572 = vunpack.c.l.b16 %v1549
        %v1573 = vunpack.c.l.b16 %v1550
        %v1574 = vpack.c.b16 %v1567, %v1566
        %v1575 = vpack.c.b16 %v1569, %v1568
        %v1576 = vpack.c.b16 %v1571, %v1570
        %v1577 = vpack.c.b16 %v1573, %v1572
        %vm1582 = vcmask 523264
        %v1584 = vsel %vm1582, %v1542, 0
        %1586 = vmatprep.subr.bf16.mxu0 0
        %1587 = vmatpush1.bf16.msra.mxu0 %v1574
        %1588 = vmatprep.subr.bf16.mxu0 0
        %1589 = vmatpush1.bf16.msra.mxu0 %v1575
        %1590 = vmatprep.subr.bf16.mxu0 0
        %1591 = vmatpush1.bf16.msra.mxu0 %v1576
        %1592 = vmatprep.subr.bf16.mxu0 0
        %1593 = vmatpush1.bf16.msra.mxu0 %v1577
        %1594 = vmatprep.subr.bf16.mxu0 0
        %1595 = vmatpush1.bf16.msra.mxu0 0
        %1596 = vmatprep.subr.bf16.mxu0 0
        %1597 = vmatpush1.bf16.msra.mxu0 0
        %1598 = vmatprep.subr.bf16.mxu0 0
        %1599 = vmatpush1.bf16.msra.mxu0 0
        %1600 = vmatprep.subr.bf16.mxu0 0
        %1601 = vmatpush1.bf16.msra.mxu0 0
        %1602 = vmatprep.subr.bf16.mxu0 0
        %1603 = vmatpush1.bf16.msra.mxu0 0
        %1604 = vmatprep.subr.bf16.mxu0 0
        %1605 = vmatpush1.bf16.msra.mxu0 0
        %1606 = vmatprep.subr.bf16.mxu0 0
        %1607 = vmatpush1.bf16.msra.mxu0 0
        %1608 = vmatprep.subr.bf16.mxu0 0
        %1609 = vmatpush1.bf16.msra.mxu0 0
        %1610 = vmatprep.subr.bf16.mxu0 0
        %1611 = vmatpush1.bf16.msra.mxu0 0
        %1612 = vmatprep.subr.bf16.mxu0 0
        %1613 = vmatpush1.bf16.msra.mxu0 0
        %1614 = vmatprep.subr.bf16.mxu0 0
        %1615 = vmatpush1.bf16.msra.mxu0 0
        %1616 = vmatprep.subr.bf16.mxu0 0
        %1617 = vmatpush1.bf16.msra.mxu0 0
        %1618 = vmatprep.mubr.bf16.mxu0 0
        %1619 = vmatmul.mubr.bf16.gmra.mrb[0].mxu0 %v1584
        %v1620 = vpop.f32.mrb[0].mxu0
        %v1621 = vadd.f32 %v1556, %v1620
        %v1622 = vpop.f32.mrb[0].mxu0
        %v1623 = vpop.f32.mrb[0].mxu0
        %v1624 = vpop.f32.mrb[0].mxu0
        %1625 = vdwg.mxu0
        %v1626 = vadd.f32 %v1621, %v1473
        %v1627 = vsel %vm736, %v1626, 0.0
        %1628 = vadd.xlane.f32.xlu0 %v1627
        %v1629 = vpop.xlane.xlu0 %1628
        %v1630 = vmul.f32 %v1629, %v1447
        %v1631 = vsub.f32 %v1626, %v1630
        %v1632 = vmul.f32 %v1631, %v1631
        %v1633 = vsel %vm736, %v1632, 0.0
        %1634 = vadd.xlane.f32.xlu0 %v1633
        %v1635 = vpop.xlane.xlu0 %1634
        %v1636 = vmul.f32 %v1635, %v1447
        %v1637 = vadd.f32 %v1636, 1e-05
        %v1638 = vrsqrt.pop %v1637
        %v1639 = vmul.f32 %v1631, %v1638
        %v1640 = vld [vmem:[#allocation16] sm:$0x1]
        %v1642 = vlaneseq
        %v1643 = vshrl.u32 %v1642, 7
        %v1644 = vsub.s32 0, %v1643
        %v1645 = vrot.slane %v1640, %v1644
        %v1647 = vmul.f32 %v1639, %v1645
        %v1648 = vld [vmem:[#allocation17] sm:$0x1]
        %v1650 = vlaneseq
        %v1651 = vshrl.u32 %v1650, 7
        %v1652 = vsub.s32 0, %v1651
        %v1653 = vrot.slane %v1648, %v1652
        %v1655 = vadd.f32 %v1647, %v1653
        %1656 = vst.msk [vmem:[%s698] sm:$0xff] %vm736, %v1655
        %s1657 = sand.u32 %s412, 1
        %s1658 = scalar_lea.sflag [#allocation4], %s1657
        %s1659 = sand.u32 %s412, 1
        %s1660 = smul.addr %s1659, 8
        %s1661 = scalar_lea.vmem [#allocation19], %s1660
        %s1662 = sand.u32 %s438, 1
        %s1663 = scalar_lea.sflag [#allocation21], %s1662
        %s1664 = sand.u32 %s438, 1
        %s1665 = smul.addr %s1664, 32
        %s1666 = scalar_lea.vmem [#allocation20], %s1665
        // Predicated region
        $region129: #{encoder_block.1} parent=87 // pred_check
          %p1667 = pneg %p422
        $region130: #{encoder_block.1} parent=87 // pred_check_branch
          %1669 = sbr.rel (%p1667) target = $region132
        $region131: #{encoder_block.1} parent=87 // pred_region
          %s1671 = ssub.s32 128, 128
          %1672 = vsyncadd %s1658, %s1671
          %s1673 = smul.addr %s42, 128
          %s1674 = scalar_lea.hbm %s17, %s1673
          %s1676 = sshll.u32 %s1661, 4
          %s1677 = int_to_ptr.vmem [resolvable:$true] %s1676
          %1679 = dma.vmem_to_hbm [thread:$0]  %s1677, 128, %s1674, %s1658
        $region132: #{encoder_block.1} parent=87 // pred_fallthru
          _
        // Predicated region
        $region133: #{encoder_block.1} parent=87 // pred_check
          %p1680 = pneg %p448
        $region134: #{encoder_block.1} parent=87 // pred_check_branch
          %1682 = sbr.rel (%p1680) target = $region136
        $region135: #{encoder_block.1} parent=87 // pred_region
          %s1684 = ssub.s32 512, 512
          %1685 = vsyncadd %s1663, %s1684
          %s1686 = smul.addr %s42, 4
          %s1687 = smul.addr %s1686, 128
          %s1688 = scalar_lea.hbm %s18, %s1687
          %s1689 = sshll.u32 %s1666, 4
          %s1690 = int_to_ptr.vmem [resolvable:$true] %s1689
          %1695 = dma.vmem_to_hbm [thread:$0]  %s1690, 512, %s1688, %s1663, 128, 128, 8
        $region136: #{encoder_block.1} parent=87 // pred_fallthru
          _
      $region88: #{encoder_block.1} parent=5 // pred_fallthru
        _
      %p1696 = scmp.le.s32.totalorder 2, %s37
      // Predicated region
      $region137: #{encoder_block.1} parent=5 // pred_check
        %p1697 = pneg %p1696
      $region138: #{encoder_block.1} parent=5 // pred_check_branch
        %1699 = sbr.rel (%p1697) target = $region140
      $region139: #{encoder_block.1} parent=5 // pred_region
        %s1700 = ssub.s32 %s37, 2
        // Predicated region
        $region141: #{encoder_block.1} parent=139 // pred_check
          %p1701 = pneg %p428
        $region142: #{encoder_block.1} parent=139 // pred_check_branch
          %1703 = sbr.rel (%p1701) target = $region144
        $region143: #{encoder_block.1} parent=139 // pred_region
          %s1704 = sand.u32 %s413, 1
          %s1705 = scalar_lea.sflag [#allocation4], %s1704
          %s1706 = sand.u32 %s413, 1
          %s1707 = smul.addr %s1706, 8
          %s1708 = scalar_lea.vmem [#allocation19], %s1707
          %1709 = dma.done %s1705, 128
        $region144: #{encoder_block.1} parent=139 // pred_fallthru
          _
        // Predicated region
        $region145: #{encoder_block.1} parent=139 // pred_check
          %p1710 = pneg %p454
        $region146: #{encoder_block.1} parent=139 // pred_check_branch
          %1712 = sbr.rel (%p1710) target = $region148
        $region147: #{encoder_block.1} parent=139 // pred_region
          %s1713 = sand.u32 %s439, 1
          %s1714 = scalar_lea.sflag [#allocation21], %s1713
          %s1715 = sand.u32 %s439, 1
          %s1716 = smul.addr %s1715, 32
          %s1717 = scalar_lea.vmem [#allocation20], %s1716
          %1718 = dma.done %s1714, 512
        $region148: #{encoder_block.1} parent=139 // pred_fallthru
          _
      $region140: #{encoder_block.1} parent=5 // pred_fallthru
        _
    $region6: #{encoder_block.1} parent=1 // loop_footer
      %s41 = sadd.s32 1, %s37
    $region7: #{encoder_block.1} parent=1 // loop_footer_branch
      %36 = sbr.rel target = $region3
    $region8: #{encoder_block.1} parent=1 // loop_exit
      _
    %1719 = vsyncpa [#allocation3], 1
    %s1720 = scalar_lea.sflag [#allocation3], 1
    %1721 = vsyncpa %s1720, 1
    %1722 = vsyncpa [#allocation6], 1
    %1723 = vsyncpa [#allocation9], 1
    %1724 = vsyncpa [#allocation12], 1
    %1725 = vsyncpa [#allocation15], 1
    %1726 = vsyncpa [#allocation18], 1
    %1727 = vsyncpa [#allocation4], 1
    %s1728 = scalar_lea.sflag [#allocation4], 1
    %1729 = vsyncpa %s1728, 1
    %1730 = vsyncpa [#allocation21], 1
    %s1731 = scalar_lea.sflag [#allocation21], 1
    %1732 = vsyncpa %s1731, 1

</llo_original>
